<compile_context>
chip_gen: v7x
topology: tpu7x:2x2x1
jax: 0.10.0
libtpu: 0.0.40
codegen_flags: <defaults>
</compile_context>

<pallas_src>
import functools

import jax
import jax.numpy as jnp
import numpy as np
from jax.experimental import pallas as pl
from jax.experimental.pallas import tpu as pltpu


# ----------------------------- Pallas kernel -----------------------------

def _bert_input_kernel(tok_ref, pos_ref, sel_ref, segd_ref, g_ref, b_ref, o_ref,
                       *, eps, n_segments, tiles_per_seq, pos_reps):
    tile = tok_ref.shape[0]
    tok = tok_ref[...].astype(jnp.float32)           # (tile, D) gathered token rows
    sel = sel_ref[...].astype(jnp.float32)           # (tile, 1) segment id as float

    # Positional(+segment-0) rows for this tile from the VMEM-resident (S, D) table.
    if pos_reps > 1:                                  # tile spans pos_reps whole sequences
        p = pos_ref[...].astype(jnp.float32)          # (S, D)
        pos = jnp.concatenate([p] * pos_reps, axis=0)
    elif tiles_per_seq > 1:                           # tile is a slice of one sequence
        j = pl.program_id(0) % tiles_per_seq
        off = pl.multiple_of(j * tile, 8)
        pos = pos_ref[pl.ds(off, tile), :].astype(jnp.float32)
    else:                                             # tile == one whole sequence
        pos = pos_ref[...].astype(jnp.float32)

    h = tok + pos
    if n_segments == 2:
        # seg0 is folded into pos; segd holds (seg1 - seg0): 1 mul + 1 add per element.
        h = h + sel * segd_ref[...].astype(jnp.float32)          # (tile,1)*(1,D)
    elif n_segments > 2:
        segd = segd_ref[...].astype(jnp.float32)                 # (n_seg-1, D)
        for s in range(1, n_segments):
            h = h + (sel == s).astype(jnp.float32) * segd[s - 1:s, :]

    # LayerNorm over the feature axis, f32 math.  sum(h) and sum(h*h) are independent
    # XLU reductions (E[x^2] - E[x]^2 form), removing one full-tile elementwise pass.
    inv_d = 1.0 / h.shape[-1]
    mean = jnp.sum(h, axis=-1, keepdims=True) * inv_d
    ex2 = jnp.sum(h * h, axis=-1, keepdims=True) * inv_d
    var = ex2 - mean * mean
    y = (h - mean) * jax.lax.rsqrt(var + eps)
    # Dropout -> identity (eval mode).
    o_ref[...] = (y * g_ref[...].astype(jnp.float32)
                  + b_ref[...].astype(jnp.float32)).astype(o_ref.dtype)


# ----------------------------- Tiling helper -----------------------------

def _pick_row_tile(batch, seq_len, d_model, *, target_rows=1024, max_block_bytes=4 << 20):
    """Row tile over the flattened (B*S) axis.

    Prefers tiles that cover whole sequences (tile = k*S, k | B) so the resident
    positional table can simply be replicated; otherwise falls back to a divisor of S.
    Caps the tile so one (tile, D) f32 buffer stays small enough to double-buffer
    comfortably inside v7x's 64 MiB VMEM.
    """
    if seq_len % 8 != 0:
        raise ValueError(f"seq_len must be a multiple of 8 for (8,128) tiling, got {seq_len}")
    cap = max(8, min(target_rows, max_block_bytes // (d_model * 4)))
    cap -= cap % 8
    if seq_len <= cap:
        k = max(1, min(batch, cap // seq_len))
        while batch % k:
            k -= 1
        return k * seq_len
    t = cap
    while t >= 8 and seq_len % t:
        t -= 8
    if t < 8:
        raise ValueError(f"no valid row tile for seq_len={seq_len}")
    return t


# ----------------------------- Wrapper -----------------------------

def bert_input_forward(x, segment, params, *, eps=1e-5, out_dtype=None,
                       row_tile_target=1024):
    """x: (B, S) int32 token ids, segment: (B, S) int32 segment ids -> (B, S, D)."""
    B, S = x.shape
    tok_emb = params["tok_emb"]        # (vocab, D)
    pos_emb = params["pos_emb"]        # (maxlen, D)
    seg_emb = params["seg_emb"]        # (n_segments, D)
    D = tok_emb.shape[1]
    n_segments = seg_emb.shape[0]
    if S > pos_emb.shape[0]:
        raise ValueError("sequence longer than positional table")
    if D % 128 != 0:
        raise ValueError("d_model must be lane-dense (multiple of 128)")
    out_dtype = tok_emb.dtype if out_dtype is None else jnp.dtype(out_dtype)
    # Note: a 16-bit out_dtype additionally wants tile % 16 == 0 (sublane packing);
    # the tiles produced here (multiples of S >= 128, or divisors of S) satisfy it
    # for standard BERT shapes.

    N = B * S
    tile = _pick_row_tile(B, S, D, target_rows=row_tile_target)
    num_tiles = N // tile
    if tile >= S:
        pos_reps, tiles_per_seq = tile // S, 1
    else:
        pos_reps, tiles_per_seq = 1, S // tile

    # Token-embedding gather stays in XLA (see header note); everything after it fuses.
    tok = jnp.take(tok_emb, x.reshape(N), axis=0)                      # (N, D)
    # Positional table with segment-0 folded in; read from HBM once (constant index_map).
    pos_eff = (pos_emb[:S] + seg_emb[0]).astype(tok_emb.dtype)         # (S, D)
    if n_segments >= 2:
        seg_delta = (seg_emb[1:] - seg_emb[0:1]).astype(tok_emb.dtype)  # (n_seg-1, D)
    else:
        seg_delta = jnp.zeros((1, D), tok_emb.dtype)
    sel = segment.reshape(N, 1).astype(jnp.float32)                    # (N, 1)

    kern = functools.partial(_bert_input_kernel, eps=eps, n_segments=n_segments,
                             tiles_per_seq=tiles_per_seq, pos_reps=pos_reps)

    # Alias the gathered-token input buffer to the output (same shape/dtype) to save
    # one (B,S,D) HBM allocation while the gather remains outside the kernel.
    alias = {0: 0} if out_dtype == tok_emb.dtype else {}

    out2d = pl.pallas_call(
        kern,
        out_shape=jax.ShapeDtypeStruct((N, D), out_dtype),
        grid=(num_tiles,),
        in_specs=[
            # gathered token rows, lane-dense (tile, D) blocks
            pl.BlockSpec((tile, D), lambda i: (i, 0)),
            # pos(+seg0) table, VMEM-resident (constant block index -> single HBM read)
            pl.BlockSpec((S, D), lambda i: (0, 0)),
            # per-row segment selector
            pl.BlockSpec((tile, 1), lambda i: (i, 0)),
            # tiny segment-delta table, resident
            pl.BlockSpec((seg_delta.shape[0], D), lambda i: (0, 0)),
            # LayerNorm gamma / beta, resident
            pl.BlockSpec((1, D), lambda i: (0, 0)),
            pl.BlockSpec((1, D), lambda i: (0, 0)),
        ],
        out_specs=pl.BlockSpec((tile, D), lambda i: (i, 0)),
        input_output_aliases=alias,
        compiler_params=pltpu.CompilerParams(
            dimension_semantics=("parallel",),
            vmem_limit_bytes=32 * 1024 * 1024,   # usage is ~<16 MiB; safe on v7x's 64 MiB
        ),
    )(tok, pos_eff, sel, seg_delta,
      params["ln_g"].reshape(1, D), params["ln_b"].reshape(1, D))
    return out2d.reshape(B, S, D)


# ----------------------------- Parameters -----------------------------

def init_params(key, *, vocab, maxlen, n_segments, d_model):
    k0, k1, k2, k3, k4 = jax.random.split(key, 5)

    def normal(k, shape, scale=0.02):
        return (scale * jax.random.normal(k, shape)).astype(jnp.float32)

    return {
        "tok_emb": normal(k0, (vocab, d_model)),
        "pos_emb": normal(k1, (maxlen, d_model)),
        "seg_emb": normal(k2, (n_segments, d_model)),
        "ln_g": (1.0 + 0.1 * jax.random.normal(k3, (d_model,))).astype(jnp.float32),
        "ln_b": (0.1 * jax.random.normal(k4, (d_model,))).astype(jnp.float32),
    }


# ----------------------------- Pure-JAX reference -----------------------------

def ref_forward(x, segment, params, eps=1e-5):
    B, S = x.shape
    tok = jnp.take(params["tok_emb"], x, axis=0)
    pos = params["pos_emb"][:S][None, :, :]
    seg = jnp.take(params["seg_emb"], segment, axis=0)
    h = tok + pos + seg
    mean = jnp.mean(h, axis=-1, keepdims=True)
    var = jnp.mean((h - mean) ** 2, axis=-1, keepdims=True)
    return (h - mean) / jnp.sqrt(var + eps) * params["ln_g"] + params["ln_b"]


# ----------------------------- Main -----------------------------

if __name__ == "__main__":
    # Small shapes consistent with BertConfig (d_model=384, maxlen=512, n_segments=2);
    # batch/seq/vocab reduced for the synthetic test.
    B, S = 2, 128
    D = 384
    MAXLEN = 512
    VOCAB = 1000
    N_SEG = 2

    key = jax.random.PRNGKey(0)
    pkey, xkey, skey = jax.random.split(key, 3)
    params = init_params(pkey, vocab=VOCAB, maxlen=MAXLEN,
                         n_segments=N_SEG, d_model=D)
    x = jax.random.randint(xkey, (B, S), 0, VOCAB, dtype=jnp.int32)
    segment = jax.random.randint(skey, (B, S), 0, N_SEG, dtype=jnp.int32)

    fwd = jax.jit(bert_input_forward)
    out = jax.block_until_ready(fwd(x, segment, params))
    assert out.shape == (B, S, D)

    ref = ref_forward(x, segment, params)
    np.testing.assert_allclose(np.asarray(out), np.asarray(ref),
                               rtol=2e-3, atol=2e-3)
    print("KERNEL_OK")
</pallas_src>

<mosaic_0001>
module attributes {stable_mosaic.version = 11 : i64} {
  func.func @_bert_input_kernel(%arg0: i32, %arg1: memref<256x384xf32, #tpu.memory_space<vmem>>, %arg2: memref<128x384xf32, #tpu.memory_space<vmem>>, %arg3: memref<256x1xf32, #tpu.memory_space<vmem>>, %arg4: memref<1x384xf32, #tpu.memory_space<vmem>>, %arg5: memref<1x384xf32, #tpu.memory_space<vmem>>, %arg6: memref<1x384xf32, #tpu.memory_space<vmem>>, %arg7: memref<256x384xf32, #tpu.memory_space<vmem>>) attributes {dimension_semantics = [#tpu.dimension_semantics<parallel>], iteration_bounds = array<i64: 1>, scalar_prefetch = 0 : i64, scratch_operands = 0 : i64, tpu.core_type = #tpu.core_type<tc>, window_params = [{transform_indices = @transform_0, window_bounds = array<i64: 256, 384>}, {pipeline_mode = #tpu.pipeline_mode<synchronous>, transform_indices = @transform_1, window_bounds = array<i64: 128, 384>}, {transform_indices = @transform_2, window_bounds = array<i64: 256, 1>}, {pipeline_mode = #tpu.pipeline_mode<synchronous>, transform_indices = @transform_3, window_bounds = array<i64: 1, 384>}, {pipeline_mode = #tpu.pipeline_mode<synchronous>, transform_indices = @transform_4, window_bounds = array<i64: 1, 384>}, {pipeline_mode = #tpu.pipeline_mode<synchronous>, transform_indices = @transform_5, window_bounds = array<i64: 1, 384>}, {transform_indices = @transform_6, window_bounds = array<i64: 256, 384>}]} {
    %c0 = arith.constant 0 : index
    %c0_0 = arith.constant 0 : index
    %0 = vector.load %arg1[%c0, %c0_0] : memref<256x384xf32, #tpu.memory_space<vmem>>, vector<256x384xf32>
    %c0_1 = arith.constant 0 : index
    %c0_2 = arith.constant 0 : index
    %1 = vector.load %arg3[%c0_1, %c0_2] : memref<256x1xf32, #tpu.memory_space<vmem>>, vector<256x1xf32>
    %c0_3 = arith.constant 0 : index
    %c0_4 = arith.constant 0 : index
    %2 = vector.load %arg2[%c0_3, %c0_4] : memref<128x384xf32, #tpu.memory_space<vmem>>, vector<128x384xf32>
    %3 = tpu.concatenate %2, %2 in 0 : vector<128x384xf32>, vector<128x384xf32> -> vector<256x384xf32>
    %4 = arith.addf %0, %3 : vector<256x384xf32>
    %c0_5 = arith.constant 0 : index
    %c0_6 = arith.constant 0 : index
    %5 = vector.load %arg4[%c0_5, %c0_6] : memref<1x384xf32, #tpu.memory_space<vmem>>, vector<1x384xf32>
    %6 = vector.broadcast %1 : vector<256x1xf32> to vector<256x384xf32>
    %7 = vector.broadcast %5 : vector<1x384xf32> to vector<256x384xf32>
    %8 = arith.mulf %6, %7 : vector<256x384xf32>
    %9 = arith.addf %4, %8 : vector<256x384xf32>
    %cst = arith.constant dense<0.000000e+00> : vector<256xf32>
    %10 = vector.multi_reduction <add>, %9, %cst [1] : vector<256x384xf32> to vector<256xf32>
    %11 = vector.shape_cast %10 : vector<256xf32> to vector<256x1xf32>
    %cst_7 = arith.constant 0.00260416674 : f32
    %12 = vector.broadcast %cst_7 : f32 to vector<256x1xf32>
    %13 = arith.mulf %11, %12 : vector<256x1xf32>
    %14 = arith.mulf %9, %9 : vector<256x384xf32>
    %cst_8 = arith.constant dense<0.000000e+00> : vector<256xf32>
    %15 = vector.multi_reduction <add>, %14, %cst_8 [1] : vector<256x384xf32> to vector<256xf32>
    %16 = vector.shape_cast %15 : vector<256xf32> to vector<256x1xf32>
    %cst_9 = arith.constant 0.00260416674 : f32
    %17 = vector.broadcast %cst_9 : f32 to vector<256x1xf32>
    %18 = arith.mulf %16, %17 : vector<256x1xf32>
    %19 = arith.mulf %13, %13 : vector<256x1xf32>
    %20 = arith.subf %18, %19 : vector<256x1xf32>
    %21 = vector.broadcast %13 : vector<256x1xf32> to vector<256x384xf32>
    %22 = arith.subf %9, %21 : vector<256x384xf32>
    %cst_10 = arith.constant 9.99999974E-6 : f32
    %23 = vector.broadcast %cst_10 : f32 to vector<256x1xf32>
    %24 = arith.addf %20, %23 : vector<256x1xf32>
    %25 = math.rsqrt %24 : vector<256x1xf32>
    %26 = vector.broadcast %25 : vector<256x1xf32> to vector<256x384xf32>
    %27 = arith.mulf %22, %26 : vector<256x384xf32>
    %c0_11 = arith.constant 0 : index
    %c0_12 = arith.constant 0 : index
    %28 = vector.load %arg5[%c0_11, %c0_12] : memref<1x384xf32, #tpu.memory_space<vmem>>, vector<1x384xf32>
    %29 = vector.broadcast %28 : vector<1x384xf32> to vector<256x384xf32>
    %30 = arith.mulf %27, %29 : vector<256x384xf32>
    %c0_13 = arith.constant 0 : index
    %c0_14 = arith.constant 0 : index
    %31 = vector.load %arg6[%c0_13, %c0_14] : memref<1x384xf32, #tpu.memory_space<vmem>>, vector<1x384xf32>
    %32 = vector.broadcast %31 : vector<1x384xf32> to vector<256x384xf32>
    %33 = arith.addf %30, %32 : vector<256x384xf32>
    %c0_15 = arith.constant 0 : index
    %c0_16 = arith.constant 0 : index
    %34 = vector.load %arg7[%c0_15, %c0_16] : memref<256x384xf32, #tpu.memory_space<vmem>>, vector<256x384xf32>
    tpu.vector_store %arg7[%c0_15, %c0_16], %33 {strides = array<i32>} : memref<256x384xf32, #tpu.memory_space<vmem>>, vector<256x384xf32>,
    return
  }
  func.func @transform_0(%arg0: i32) -> (i32, i32) {
    %c0_i32 = arith.constant 0 : i32
    %c0_i32_0 = arith.constant 0 : i32
    return %arg0, %c0_i32 : i32, i32
  }
  func.func @transform_1(%arg0: i32) -> (i32, i32) {
    %c0_i32 = arith.constant 0 : i32
    %c0_i32_0 = arith.constant 0 : i32
    %c0_i32_1 = arith.constant 0 : i32
    return %c0_i32, %c0_i32_0 : i32, i32
  }
  func.func @transform_2(%arg0: i32) -> (i32, i32) {
    %c0_i32 = arith.constant 0 : i32
    %c0_i32_0 = arith.constant 0 : i32
    return %arg0, %c0_i32 : i32, i32
  }
  func.func @transform_3(%arg0: i32) -> (i32, i32) {
    %c0_i32 = arith.constant 0 : i32
    %c0_i32_0 = arith.constant 0 : i32
    %c0_i32_1 = arith.constant 0 : i32
    return %c0_i32, %c0_i32_0 : i32, i32
  }
  func.func @transform_4(%arg0: i32) -> (i32, i32) {
    %c0_i32 = arith.constant 0 : i32
    %c0_i32_0 = arith.constant 0 : i32
    %c0_i32_1 = arith.constant 0 : i32
    return %c0_i32, %c0_i32_0 : i32, i32
  }
  func.func @transform_5(%arg0: i32) -> (i32, i32) {
    %c0_i32 = arith.constant 0 : i32
    %c0_i32_0 = arith.constant 0 : i32
    %c0_i32_1 = arith.constant 0 : i32
    return %c0_i32, %c0_i32_0 : i32, i32
  }
  func.func @transform_6(%arg0: i32) -> (i32, i32) {
    %c0_i32 = arith.constant 0 : i32
    %c0_i32_0 = arith.constant 0 : i32
    return %arg0, %c0_i32 : i32, i32
  }
}

</mosaic_0001>

<llo_original>
// kernel: bert_input_forward.1
$region0: #{bert_input_forward.1}
  #allocation0 [shape = 'u32[]', space=smem, size = 0x4, offset = 0x4, fixed_abs, tag = 'smem constant byte address 0x4 - core index']
  #allocation1 [shape = 'u32[144,128]{1,0:T(1,128)}', space=vmem, size = 0x12000, scoped, tag = 'internal scratch']
  %s0 = inlined_call_operand.vmem [shape: f32[256,384], index: 0, kind: input, shape index: {}, may-alias: {0,6}]
  %s1 = inlined_call_operand.vmem [shape: f32[128,384], index: 1, kind: input, shape index: {}]
  %s2 = inlined_call_operand.vmem [shape: f32[256,1], index: 2, kind: input, shape index: {}]
  %s3 = inlined_call_operand.vmem [shape: f32[1,384], index: 3, kind: input, shape index: {}]
  %s4 = inlined_call_operand.vmem [shape: f32[1,384], index: 4, kind: input, shape index: {}]
  %s5 = inlined_call_operand.vmem [shape: f32[1,384], index: 5, kind: input, shape index: {}]
  %s6 = inlined_call_operand.vmem [shape: f32[256,384], index: 6, kind: output, shape index: {}, may-alias: {0,6}]
  %s7 = sld [smem:[#allocation0]]
  $region34: #{bert_input_forward.1} parent=0
    _
  %s9 = ssub.s32 1, %s7
  %s10 = scalar_select 0, %s9, %s7
  // Predicated region
  $region2: #{bert_input_forward.1} parent=0 // pred_check
    _
  $region3: #{bert_input_forward.1} parent=0 // pred_check_branch
    %12 = sbr.rel (0) target = $region5
  $region4: #{bert_input_forward.1} parent=0 // pred_region
    _
  $region5: #{bert_input_forward.1} parent=0 // pred_fallthru
    _
  // Predicated region
  $region6: #{bert_input_forward.1} parent=0 // pred_check
    _
  $region7: #{bert_input_forward.1} parent=0 // pred_check_branch
    %14 = sbr.rel (0) target = $region9
  $region8: #{bert_input_forward.1} parent=0 // pred_region
    _
  $region9: #{bert_input_forward.1} parent=0 // pred_fallthru
    _
  // Predicated region
  $region10: #{bert_input_forward.1} parent=0 // pred_check
    _
  $region11: #{bert_input_forward.1} parent=0 // pred_check_branch
    %16 = sbr.rel (0) target = $region13
  $region12: #{bert_input_forward.1} parent=0 // pred_region
    _
  $region13: #{bert_input_forward.1} parent=0 // pred_fallthru
    _
  // Predicated region
  $region14: #{bert_input_forward.1} parent=0 // pred_check
    _
  $region15: #{bert_input_forward.1} parent=0 // pred_check_branch
    %18 = sbr.rel (0) target = $region17
  $region16: #{bert_input_forward.1} parent=0 // pred_region
    _
  $region17: #{bert_input_forward.1} parent=0 // pred_fallthru
    _
  // Predicated region
  $region18: #{bert_input_forward.1} parent=0 // pred_check
    _
  $region19: #{bert_input_forward.1} parent=0 // pred_check_branch
    %20 = sbr.rel (0) target = $region21
  $region20: #{bert_input_forward.1} parent=0 // pred_region
    _
  $region21: #{bert_input_forward.1} parent=0 // pred_fallthru
    _
  // Predicated region
  $region22: #{bert_input_forward.1} parent=0 // pred_check
    _
  $region23: #{bert_input_forward.1} parent=0 // pred_check_branch
    %22 = sbr.rel (0) target = $region25
  $region24: #{bert_input_forward.1} parent=0 // pred_region
    _
  $region25: #{bert_input_forward.1} parent=0 // pred_fallthru
    _
  %v23 = vld [vmem:[%s0] sm:$0xff]
  %v24 = vld [vmem:[%s0 + $0x8] sm:$0xff]
  %v25 = vld [vmem:[%s0 + $0x10] sm:$0xff]
  %v26 = vld [vmem:[%s0 + $0x18] sm:$0xff]
  %v27 = vld [vmem:[%s0 + $0x20] sm:$0xff]
  %v28 = vld [vmem:[%s0 + $0x28] sm:$0xff]
  %v29 = vld [vmem:[%s0 + $0x30] sm:$0xff]
  %v30 = vld [vmem:[%s0 + $0x38] sm:$0xff]
  %v31 = vld [vmem:[%s0 + $0x40] sm:$0xff]
  %v32 = vld [vmem:[%s0 + $0x48] sm:$0xff]
  %v33 = vld [vmem:[%s0 + $0x50] sm:$0xff]
  %v34 = vld [vmem:[%s0 + $0x58] sm:$0xff]
  %v35 = vld [vmem:[%s0 + $0x60] sm:$0xff]
  %v36 = vld [vmem:[%s0 + $0x68] sm:$0xff]
  %v37 = vld [vmem:[%s0 + $0x70] sm:$0xff]
  %v38 = vld [vmem:[%s0 + $0x78] sm:$0xff]
  %v39 = vld [vmem:[%s0 + $0x80] sm:$0xff]
  %v40 = vld [vmem:[%s0 + $0x88] sm:$0xff]
  %v41 = vld [vmem:[%s0 + $0x90] sm:$0xff]
  %v42 = vld [vmem:[%s0 + $0x98] sm:$0xff]
  %v43 = vld [vmem:[%s0 + $0xa0] sm:$0xff]
  %v44 = vld [vmem:[%s0 + $0xa8] sm:$0xff]
  %v45 = vld [vmem:[%s0 + $0xb0] sm:$0xff]
  %v46 = vld [vmem:[%s0 + $0xb8] sm:$0xff]
  %v47 = vld [vmem:[%s0 + $0xc0] sm:$0xff]
  %v48 = vld [vmem:[%s0 + $0xc8] sm:$0xff]
  %v49 = vld [vmem:[%s0 + $0xd0] sm:$0xff]
  %v50 = vld [vmem:[%s0 + $0xd8] sm:$0xff]
  %v51 = vld [vmem:[%s0 + $0xe0] sm:$0xff]
  %v52 = vld [vmem:[%s0 + $0xe8] sm:$0xff]
  %v53 = vld [vmem:[%s0 + $0xf0] sm:$0xff]
  %v54 = vld [vmem:[%s0 + $0xf8] sm:$0xff]
  %v55 = vld [vmem:[%s0 + $0x100] sm:$0xff]
  %v56 = vld [vmem:[%s0 + $0x108] sm:$0xff]
  %v57 = vld [vmem:[%s0 + $0x110] sm:$0xff]
  %v58 = vld [vmem:[%s0 + $0x118] sm:$0xff]
  %v59 = vld [vmem:[%s0 + $0x120] sm:$0xff]
  %v60 = vld [vmem:[%s0 + $0x128] sm:$0xff]
  %v61 = vld [vmem:[%s0 + $0x130] sm:$0xff]
  %v62 = vld [vmem:[%s0 + $0x138] sm:$0xff]
  %v63 = vld [vmem:[%s0 + $0x140] sm:$0xff]
  %v64 = vld [vmem:[%s0 + $0x148] sm:$0xff]
  %v65 = vld [vmem:[%s0 + $0x150] sm:$0xff]
  %v66 = vld [vmem:[%s0 + $0x158] sm:$0xff]
  %v67 = vld [vmem:[%s0 + $0x160] sm:$0xff]
  %v68 = vld [vmem:[%s0 + $0x168] sm:$0xff]
  %v69 = vld [vmem:[%s0 + $0x170] sm:$0xff]
  %v70 = vld [vmem:[%s0 + $0x178] sm:$0xff]
  %v71 = vld [vmem:[%s0 + $0x180] sm:$0xff]
  %v72 = vld [vmem:[%s0 + $0x188] sm:$0xff]
  %v73 = vld [vmem:[%s0 + $0x190] sm:$0xff]
  %v74 = vld [vmem:[%s0 + $0x198] sm:$0xff]
  %v75 = vld [vmem:[%s0 + $0x1a0] sm:$0xff]
  %v76 = vld [vmem:[%s0 + $0x1a8] sm:$0xff]
  %v77 = vld [vmem:[%s0 + $0x1b0] sm:$0xff]
  %v78 = vld [vmem:[%s0 + $0x1b8] sm:$0xff]
  %v79 = vld [vmem:[%s0 + $0x1c0] sm:$0xff]
  %v80 = vld [vmem:[%s0 + $0x1c8] sm:$0xff]
  %v81 = vld [vmem:[%s0 + $0x1d0] sm:$0xff]
  %v82 = vld [vmem:[%s0 + $0x1d8] sm:$0xff]
  %v83 = vld [vmem:[%s0 + $0x1e0] sm:$0xff]
  %v84 = vld [vmem:[%s0 + $0x1e8] sm:$0xff]
  %v85 = vld [vmem:[%s0 + $0x1f0] sm:$0xff]
  %v86 = vld [vmem:[%s0 + $0x1f8] sm:$0xff]
  %v87 = vld [vmem:[%s0 + $0x200] sm:$0xff]
  %v88 = vld [vmem:[%s0 + $0x208] sm:$0xff]
  %v89 = vld [vmem:[%s0 + $0x210] sm:$0xff]
  %v90 = vld [vmem:[%s0 + $0x218] sm:$0xff]
  %v91 = vld [vmem:[%s0 + $0x220] sm:$0xff]
  %v92 = vld [vmem:[%s0 + $0x228] sm:$0xff]
  %v93 = vld [vmem:[%s0 + $0x230] sm:$0xff]
  %v94 = vld [vmem:[%s0 + $0x238] sm:$0xff]
  %v95 = vld [vmem:[%s0 + $0x240] sm:$0xff]
  %v96 = vld [vmem:[%s0 + $0x248] sm:$0xff]
  %v97 = vld [vmem:[%s0 + $0x250] sm:$0xff]
  %v98 = vld [vmem:[%s0 + $0x258] sm:$0xff]
  %v99 = vld [vmem:[%s0 + $0x260] sm:$0xff]
  %v100 = vld [vmem:[%s0 + $0x268] sm:$0xff]
  %v101 = vld [vmem:[%s0 + $0x270] sm:$0xff]
  %v102 = vld [vmem:[%s0 + $0x278] sm:$0xff]
  %v103 = vld [vmem:[%s0 + $0x280] sm:$0xff]
  %v104 = vld [vmem:[%s0 + $0x288] sm:$0xff]
  %v105 = vld [vmem:[%s0 + $0x290] sm:$0xff]
  %v106 = vld [vmem:[%s0 + $0x298] sm:$0xff]
  %v107 = vld [vmem:[%s0 + $0x2a0] sm:$0xff]
  %v108 = vld [vmem:[%s0 + $0x2a8] sm:$0xff]
  %v109 = vld [vmem:[%s0 + $0x2b0] sm:$0xff]
  %v110 = vld [vmem:[%s0 + $0x2b8] sm:$0xff]
  %v111 = vld [vmem:[%s0 + $0x2c0] sm:$0xff]
  %v112 = vld [vmem:[%s0 + $0x2c8] sm:$0xff]
  %v113 = vld [vmem:[%s0 + $0x2d0] sm:$0xff]
  %v114 = vld [vmem:[%s0 + $0x2d8] sm:$0xff]
  %v115 = vld [vmem:[%s0 + $0x2e0] sm:$0xff]
  %v116 = vld [vmem:[%s0 + $0x2e8] sm:$0xff]
  %v117 = vld [vmem:[%s0 + $0x2f0] sm:$0xff]
  %v118 = vld [vmem:[%s0 + $0x2f8] sm:$0xff]
  %v119 = vld [vmem:[%s2] sm:$0xff]
  %v120 = vld [vmem:[%s2 + $0x8] sm:$0xff]
  %v121 = vld [vmem:[%s2 + $0x10] sm:$0xff]
  %v122 = vld [vmem:[%s2 + $0x18] sm:$0xff]
  %v123 = vld [vmem:[%s2 + $0x20] sm:$0xff]
  %v124 = vld [vmem:[%s2 + $0x28] sm:$0xff]
  %v125 = vld [vmem:[%s2 + $0x30] sm:$0xff]
  %v126 = vld [vmem:[%s2 + $0x38] sm:$0xff]
  %v127 = vld [vmem:[%s2 + $0x40] sm:$0xff]
  %v128 = vld [vmem:[%s2 + $0x48] sm:$0xff]
  %v129 = vld [vmem:[%s2 + $0x50] sm:$0xff]
  %v130 = vld [vmem:[%s2 + $0x58] sm:$0xff]
  %v131 = vld [vmem:[%s2 + $0x60] sm:$0xff]
  %v132 = vld [vmem:[%s2 + $0x68] sm:$0xff]
  %v133 = vld [vmem:[%s2 + $0x70] sm:$0xff]
  %v134 = vld [vmem:[%s2 + $0x78] sm:$0xff]
  %v135 = vld [vmem:[%s2 + $0x80] sm:$0xff]
  %v136 = vld [vmem:[%s2 + $0x88] sm:$0xff]
  %v137 = vld [vmem:[%s2 + $0x90] sm:$0xff]
  %v138 = vld [vmem:[%s2 + $0x98] sm:$0xff]
  %v139 = vld [vmem:[%s2 + $0xa0] sm:$0xff]
  %v140 = vld [vmem:[%s2 + $0xa8] sm:$0xff]
  %v141 = vld [vmem:[%s2 + $0xb0] sm:$0xff]
  %v142 = vld [vmem:[%s2 + $0xb8] sm:$0xff]
  %v143 = vld [vmem:[%s2 + $0xc0] sm:$0xff]
  %v144 = vld [vmem:[%s2 + $0xc8] sm:$0xff]
  %v145 = vld [vmem:[%s2 + $0xd0] sm:$0xff]
  %v146 = vld [vmem:[%s2 + $0xd8] sm:$0xff]
  %v147 = vld [vmem:[%s2 + $0xe0] sm:$0xff]
  %v148 = vld [vmem:[%s2 + $0xe8] sm:$0xff]
  %v149 = vld [vmem:[%s2 + $0xf0] sm:$0xff]
  %v150 = vld [vmem:[%s2 + $0xf8] sm:$0xff]
  %v151 = vld [vmem:[%s1] sm:$0xff]
  %v152 = vld [vmem:[%s1 + $0x8] sm:$0xff]
  %v153 = vld [vmem:[%s1 + $0x10] sm:$0xff]
  %v154 = vld [vmem:[%s1 + $0x18] sm:$0xff]
  %v155 = vld [vmem:[%s1 + $0x20] sm:$0xff]
  %v156 = vld [vmem:[%s1 + $0x28] sm:$0xff]
  %v157 = vld [vmem:[%s1 + $0x30] sm:$0xff]
  %v158 = vld [vmem:[%s1 + $0x38] sm:$0xff]
  %v159 = vld [vmem:[%s1 + $0x40] sm:$0xff]
  %v160 = vld [vmem:[%s1 + $0x48] sm:$0xff]
  %v161 = vld [vmem:[%s1 + $0x50] sm:$0xff]
  %v162 = vld [vmem:[%s1 + $0x58] sm:$0xff]
  %v163 = vld [vmem:[%s1 + $0x60] sm:$0xff]
  %v164 = vld [vmem:[%s1 + $0x68] sm:$0xff]
  %v165 = vld [vmem:[%s1 + $0x70] sm:$0xff]
  %v166 = vld [vmem:[%s1 + $0x78] sm:$0xff]
  %v167 = vld [vmem:[%s1 + $0x80] sm:$0xff]
  %v168 = vld [vmem:[%s1 + $0x88] sm:$0xff]
  %v169 = vld [vmem:[%s1 + $0x90] sm:$0xff]
  %v170 = vld [vmem:[%s1 + $0x98] sm:$0xff]
  %v171 = vld [vmem:[%s1 + $0xa0] sm:$0xff]
  %v172 = vld [vmem:[%s1 + $0xa8] sm:$0xff]
  %v173 = vld [vmem:[%s1 + $0xb0] sm:$0xff]
  %v174 = vld [vmem:[%s1 + $0xb8] sm:$0xff]
  %v175 = vld [vmem:[%s1 + $0xc0] sm:$0xff]
  %v176 = vld [vmem:[%s1 + $0xc8] sm:$0xff]
  %v177 = vld [vmem:[%s1 + $0xd0] sm:$0xff]
  %v178 = vld [vmem:[%s1 + $0xd8] sm:$0xff]
  %v179 = vld [vmem:[%s1 + $0xe0] sm:$0xff]
  %v180 = vld [vmem:[%s1 + $0xe8] sm:$0xff]
  %v181 = vld [vmem:[%s1 + $0xf0] sm:$0xff]
  %v182 = vld [vmem:[%s1 + $0xf8] sm:$0xff]
  %v183 = vld [vmem:[%s1 + $0x100] sm:$0xff]
  %v184 = vld [vmem:[%s1 + $0x108] sm:$0xff]
  %v185 = vld [vmem:[%s1 + $0x110] sm:$0xff]
  %v186 = vld [vmem:[%s1 + $0x118] sm:$0xff]
  %v187 = vld [vmem:[%s1 + $0x120] sm:$0xff]
  %v188 = vld [vmem:[%s1 + $0x128] sm:$0xff]
  %v189 = vld [vmem:[%s1 + $0x130] sm:$0xff]
  %v190 = vld [vmem:[%s1 + $0x138] sm:$0xff]
  %v191 = vld [vmem:[%s1 + $0x140] sm:$0xff]
  %v192 = vld [vmem:[%s1 + $0x148] sm:$0xff]
  %v193 = vld [vmem:[%s1 + $0x150] sm:$0xff]
  %v194 = vld [vmem:[%s1 + $0x158] sm:$0xff]
  %v195 = vld [vmem:[%s1 + $0x160] sm:$0xff]
  %v196 = vld [vmem:[%s1 + $0x168] sm:$0xff]
  %v197 = vld [vmem:[%s1 + $0x170] sm:$0xff]
  %v198 = vld [vmem:[%s1 + $0x178] sm:$0xff]
  %v199 = vadd.f32 %v23, %v151
  %v200 = vadd.f32 %v24, %v152
  %v201 = vadd.f32 %v25, %v153
  %v202 = vadd.f32 %v26, %v154
  %v203 = vadd.f32 %v27, %v155
  %v204 = vadd.f32 %v28, %v156
  %v205 = vadd.f32 %v29, %v157
  %v206 = vadd.f32 %v30, %v158
  %v207 = vadd.f32 %v31, %v159
  %v208 = vadd.f32 %v32, %v160
  %v209 = vadd.f32 %v33, %v161
  %v210 = vadd.f32 %v34, %v162
  %v211 = vadd.f32 %v35, %v163
  %v212 = vadd.f32 %v36, %v164
  %v213 = vadd.f32 %v37, %v165
  %v214 = vadd.f32 %v38, %v166
  %v215 = vadd.f32 %v39, %v167
  %v216 = vadd.f32 %v40, %v168
  %v217 = vadd.f32 %v41, %v169
  %v218 = vadd.f32 %v42, %v170
  %v219 = vadd.f32 %v43, %v171
  %v220 = vadd.f32 %v44, %v172
  %v221 = vadd.f32 %v45, %v173
  %v222 = vadd.f32 %v46, %v174
  %v223 = vadd.f32 %v47, %v175
  %v224 = vadd.f32 %v48, %v176
  %v225 = vadd.f32 %v49, %v177
  %v226 = vadd.f32 %v50, %v178
  %v227 = vadd.f32 %v51, %v179
  %v228 = vadd.f32 %v52, %v180
  %v229 = vadd.f32 %v53, %v181
  %v230 = vadd.f32 %v54, %v182
  %v231 = vadd.f32 %v55, %v183
  %v232 = vadd.f32 %v56, %v184
  %v233 = vadd.f32 %v57, %v185
  %v234 = vadd.f32 %v58, %v186
  %v235 = vadd.f32 %v59, %v187
  %v236 = vadd.f32 %v60, %v188
  %v237 = vadd.f32 %v61, %v189
  %v238 = vadd.f32 %v62, %v190
  %v239 = vadd.f32 %v63, %v191
  %v240 = vadd.f32 %v64, %v192
  %v241 = vadd.f32 %v65, %v193
  %v242 = vadd.f32 %v66, %v194
  %v243 = vadd.f32 %v67, %v195
  %v244 = vadd.f32 %v68, %v196
  %v245 = vadd.f32 %v69, %v197
  %v246 = vadd.f32 %v70, %v198
  %v247 = vadd.f32 %v71, %v151
  %v248 = vadd.f32 %v72, %v152
  %v249 = vadd.f32 %v73, %v153
  %v250 = vadd.f32 %v74, %v154
  %v251 = vadd.f32 %v75, %v155
  %v252 = vadd.f32 %v76, %v156
  %v253 = vadd.f32 %v77, %v157
  %v254 = vadd.f32 %v78, %v158
  %v255 = vadd.f32 %v79, %v159
  %v256 = vadd.f32 %v80, %v160
  %v257 = vadd.f32 %v81, %v161
  %v258 = vadd.f32 %v82, %v162
  %v259 = vadd.f32 %v83, %v163
  %v260 = vadd.f32 %v84, %v164
  %v261 = vadd.f32 %v85, %v165
  %v262 = vadd.f32 %v86, %v166
  %v263 = vadd.f32 %v87, %v167
  %v264 = vadd.f32 %v88, %v168
  %v265 = vadd.f32 %v89, %v169
  %v266 = vadd.f32 %v90, %v170
  %v267 = vadd.f32 %v91, %v171
  %v268 = vadd.f32 %v92, %v172
  %v269 = vadd.f32 %v93, %v173
  %v270 = vadd.f32 %v94, %v174
  %v271 = vadd.f32 %v95, %v175
  %v272 = vadd.f32 %v96, %v176
  %v273 = vadd.f32 %v97, %v177
  %v274 = vadd.f32 %v98, %v178
  %v275 = vadd.f32 %v99, %v179
  %v276 = vadd.f32 %v100, %v180
  %v277 = vadd.f32 %v101, %v181
  %v278 = vadd.f32 %v102, %v182
  %v279 = vadd.f32 %v103, %v183
  %v280 = vadd.f32 %v104, %v184
  %v281 = vadd.f32 %v105, %v185
  %v282 = vadd.f32 %v106, %v186
  %v283 = vadd.f32 %v107, %v187
  %v284 = vadd.f32 %v108, %v188
  %v285 = vadd.f32 %v109, %v189
  %v286 = vadd.f32 %v110, %v190
  %v287 = vadd.f32 %v111, %v191
  %v288 = vadd.f32 %v112, %v192
  %v289 = vadd.f32 %v113, %v193
  %v290 = vadd.f32 %v114, %v194
  %v291 = vadd.f32 %v115, %v195
  %v292 = vadd.f32 %v116, %v196
  %v293 = vadd.f32 %v117, %v197
  %v294 = vadd.f32 %v118, %v198
  %v295 = vld [vmem:[%s3] sm:$0x7]
  %297 = vset.pattern.permute.xlu0 0
  %298 = vperm.xlu0 %297, %v119
  %v299 = vpop.permute.xlu0 %298
  %302 = vset.pattern.permute.xlu0 0
  %303 = vperm.xlu0 %302, %v120
  %v304 = vpop.permute.xlu0 %303
  %307 = vset.pattern.permute.xlu0 0
  %308 = vperm.xlu0 %307, %v121
  %v309 = vpop.permute.xlu0 %308
  %312 = vset.pattern.permute.xlu0 0
  %313 = vperm.xlu0 %312, %v122
  %v314 = vpop.permute.xlu0 %313
  %317 = vset.pattern.permute.xlu0 0
  %318 = vperm.xlu0 %317, %v123
  %v319 = vpop.permute.xlu0 %318
  %322 = vset.pattern.permute.xlu0 0
  %323 = vperm.xlu0 %322, %v124
  %v324 = vpop.permute.xlu0 %323
  %327 = vset.pattern.permute.xlu0 0
  %328 = vperm.xlu0 %327, %v125
  %v329 = vpop.permute.xlu0 %328
  %332 = vset.pattern.permute.xlu0 0
  %333 = vperm.xlu0 %332, %v126
  %v334 = vpop.permute.xlu0 %333
  %337 = vset.pattern.permute.xlu0 0
  %338 = vperm.xlu0 %337, %v127
  %v339 = vpop.permute.xlu0 %338
  %342 = vset.pattern.permute.xlu0 0
  %343 = vperm.xlu0 %342, %v128
  %v344 = vpop.permute.xlu0 %343
  %347 = vset.pattern.permute.xlu0 0
  %348 = vperm.xlu0 %347, %v129
  %v349 = vpop.permute.xlu0 %348
  %352 = vset.pattern.permute.xlu0 0
  %353 = vperm.xlu0 %352, %v130
  %v354 = vpop.permute.xlu0 %353
  %357 = vset.pattern.permute.xlu0 0
  %358 = vperm.xlu0 %357, %v131
  %v359 = vpop.permute.xlu0 %358
  %362 = vset.pattern.permute.xlu0 0
  %363 = vperm.xlu0 %362, %v132
  %v364 = vpop.permute.xlu0 %363
  %367 = vset.pattern.permute.xlu0 0
  %368 = vperm.xlu0 %367, %v133
  %v369 = vpop.permute.xlu0 %368
  %372 = vset.pattern.permute.xlu0 0
  %373 = vperm.xlu0 %372, %v134
  %v374 = vpop.permute.xlu0 %373
  %377 = vset.pattern.permute.xlu0 0
  %378 = vperm.xlu0 %377, %v135
  %v379 = vpop.permute.xlu0 %378
  %382 = vset.pattern.permute.xlu0 0
  %383 = vperm.xlu0 %382, %v136
  %v384 = vpop.permute.xlu0 %383
  %387 = vset.pattern.permute.xlu0 0
  %388 = vperm.xlu0 %387, %v137
  %v389 = vpop.permute.xlu0 %388
  %392 = vset.pattern.permute.xlu0 0
  %393 = vperm.xlu0 %392, %v138
  %v394 = vpop.permute.xlu0 %393
  %397 = vset.pattern.permute.xlu0 0
  %398 = vperm.xlu0 %397, %v139
  %v399 = vpop.permute.xlu0 %398
  %402 = vset.pattern.permute.xlu0 0
  %403 = vperm.xlu0 %402, %v140
  %v404 = vpop.permute.xlu0 %403
  %407 = vset.pattern.permute.xlu0 0
  %408 = vperm.xlu0 %407, %v141
  %v409 = vpop.permute.xlu0 %408
  %412 = vset.pattern.permute.xlu0 0
  %413 = vperm.xlu0 %412, %v142
  %v414 = vpop.permute.xlu0 %413
  %417 = vset.pattern.permute.xlu0 0
  %418 = vperm.xlu0 %417, %v143
  %v419 = vpop.permute.xlu0 %418
  %422 = vset.pattern.permute.xlu0 0
  %423 = vperm.xlu0 %422, %v144
  %v424 = vpop.permute.xlu0 %423
  %427 = vset.pattern.permute.xlu0 0
  %428 = vperm.xlu0 %427, %v145
  %v429 = vpop.permute.xlu0 %428
  %432 = vset.pattern.permute.xlu0 0
  %433 = vperm.xlu0 %432, %v146
  %v434 = vpop.permute.xlu0 %433
  %437 = vset.pattern.permute.xlu0 0
  %438 = vperm.xlu0 %437, %v147
  %v439 = vpop.permute.xlu0 %438
  %442 = vset.pattern.permute.xlu0 0
  %443 = vperm.xlu0 %442, %v148
  %v444 = vpop.permute.xlu0 %443
  %447 = vset.pattern.permute.xlu0 0
  %448 = vperm.xlu0 %447, %v149
  %v449 = vpop.permute.xlu0 %448
  %452 = vset.pattern.permute.xlu0 0
  %453 = vperm.xlu0 %452, %v150
  %v454 = vpop.permute.xlu0 %453
  %v457 = vlaneseq
  %v458 = vshrl.u32 %v457, 7
  %v459 = vsub.s32 0, %v458
  %v460 = vrot.slane %v295, %v459
  %v461 = vlaneseq
  %v462 = vshrl.u32 %v461, 7
  %v463 = vsub.s32 1, %v462
  %v464 = vrot.slane %v295, %v463
  %v465 = vlaneseq
  %v466 = vshrl.u32 %v465, 7
  %v467 = vsub.s32 2, %v466
  %v468 = vrot.slane %v295, %v467
  %v472 = vmul.f32 %v299, %v460
  %v473 = vmul.f32 %v299, %v464
  %v474 = vmul.f32 %v299, %v468
  %v475 = vmul.f32 %v304, %v460
  %v476 = vmul.f32 %v304, %v464
  %v477 = vmul.f32 %v304, %v468
  %v478 = vmul.f32 %v309, %v460
  %v479 = vmul.f32 %v309, %v464
  %v480 = vmul.f32 %v309, %v468
  %v481 = vmul.f32 %v314, %v460
  %v482 = vmul.f32 %v314, %v464
  %v483 = vmul.f32 %v314, %v468
  %v484 = vmul.f32 %v319, %v460
  %v485 = vmul.f32 %v319, %v464
  %v486 = vmul.f32 %v319, %v468
  %v487 = vmul.f32 %v324, %v460
  %v488 = vmul.f32 %v324, %v464
  %v489 = vmul.f32 %v324, %v468
  %v490 = vmul.f32 %v329, %v460
  %v491 = vmul.f32 %v329, %v464
  %v492 = vmul.f32 %v329, %v468
  %v493 = vmul.f32 %v334, %v460
  %v494 = vmul.f32 %v334, %v464
  %v495 = vmul.f32 %v334, %v468
  %v496 = vmul.f32 %v339, %v460
  %v497 = vmul.f32 %v339, %v464
  %v498 = vmul.f32 %v339, %v468
  %v499 = vmul.f32 %v344, %v460
  %v500 = vmul.f32 %v344, %v464
  %v501 = vmul.f32 %v344, %v468
  %v502 = vmul.f32 %v349, %v460
  %v503 = vmul.f32 %v349, %v464
  %v504 = vmul.f32 %v349, %v468
  %v505 = vmul.f32 %v354, %v460
  %v506 = vmul.f32 %v354, %v464
  %v507 = vmul.f32 %v354, %v468
  %v508 = vmul.f32 %v359, %v460
  %v509 = vmul.f32 %v359, %v464
  %v510 = vmul.f32 %v359, %v468
  %v511 = vmul.f32 %v364, %v460
  %v512 = vmul.f32 %v364, %v464
  %v513 = vmul.f32 %v364, %v468
  %v514 = vmul.f32 %v369, %v460
  %v515 = vmul.f32 %v369, %v464
  %v516 = vmul.f32 %v369, %v468
  %v517 = vmul.f32 %v374, %v460
  %v518 = vmul.f32 %v374, %v464
  %v519 = vmul.f32 %v374, %v468
  %v520 = vmul.f32 %v379, %v460
  %v521 = vmul.f32 %v379, %v464
  %v522 = vmul.f32 %v379, %v468
  %v523 = vmul.f32 %v384, %v460
  %v524 = vmul.f32 %v384, %v464
  %v525 = vmul.f32 %v384, %v468
  %v526 = vmul.f32 %v389, %v460
  %v527 = vmul.f32 %v389, %v464
  %v528 = vmul.f32 %v389, %v468
  %v529 = vmul.f32 %v394, %v460
  %v530 = vmul.f32 %v394, %v464
  %v531 = vmul.f32 %v394, %v468
  %v532 = vmul.f32 %v399, %v460
  %v533 = vmul.f32 %v399, %v464
  %v534 = vmul.f32 %v399, %v468
  %v535 = vmul.f32 %v404, %v460
  %v536 = vmul.f32 %v404, %v464
  %v537 = vmul.f32 %v404, %v468
  %v538 = vmul.f32 %v409, %v460
  %v539 = vmul.f32 %v409, %v464
  %v540 = vmul.f32 %v409, %v468
  %v541 = vmul.f32 %v414, %v460
  %v542 = vmul.f32 %v414, %v464
  %v543 = vmul.f32 %v414, %v468
  %v544 = vmul.f32 %v419, %v460
  %v545 = vmul.f32 %v419, %v464
  %v546 = vmul.f32 %v419, %v468
  %v547 = vmul.f32 %v424, %v460
  %v548 = vmul.f32 %v424, %v464
  %v549 = vmul.f32 %v424, %v468
  %v550 = vmul.f32 %v429, %v460
  %v551 = vmul.f32 %v429, %v464
  %v552 = vmul.f32 %v429, %v468
  %v553 = vmul.f32 %v434, %v460
  %v554 = vmul.f32 %v434, %v464
  %v555 = vmul.f32 %v434, %v468
  %v556 = vmul.f32 %v439, %v460
  %v557 = vmul.f32 %v439, %v464
  %v558 = vmul.f32 %v439, %v468
  %v559 = vmul.f32 %v444, %v460
  %v560 = vmul.f32 %v444, %v464
  %v561 = vmul.f32 %v444, %v468
  %v562 = vmul.f32 %v449, %v460
  %v563 = vmul.f32 %v449, %v464
  %v564 = vmul.f32 %v449, %v468
  %v565 = vmul.f32 %v454, %v460
  %v566 = vmul.f32 %v454, %v464
  %v567 = vmul.f32 %v454, %v468
  %v568 = vadd.f32 %v199, %v472
  %v569 = vadd.f32 %v200, %v473
  %v570 = vadd.f32 %v201, %v474
  %v571 = vadd.f32 %v202, %v475
  %v572 = vadd.f32 %v203, %v476
  %v573 = vadd.f32 %v204, %v477
  %v574 = vadd.f32 %v205, %v478
  %v575 = vadd.f32 %v206, %v479
  %v576 = vadd.f32 %v207, %v480
  %v577 = vadd.f32 %v208, %v481
  %v578 = vadd.f32 %v209, %v482
  %v579 = vadd.f32 %v210, %v483
  %v580 = vadd.f32 %v211, %v484
  %v581 = vadd.f32 %v212, %v485
  %v582 = vadd.f32 %v213, %v486
  %v583 = vadd.f32 %v214, %v487
  %v584 = vadd.f32 %v215, %v488
  %v585 = vadd.f32 %v216, %v489
  %v586 = vadd.f32 %v217, %v490
  %v587 = vadd.f32 %v218, %v491
  %v588 = vadd.f32 %v219, %v492
  %v589 = vadd.f32 %v220, %v493
  %v590 = vadd.f32 %v221, %v494
  %v591 = vadd.f32 %v222, %v495
  %v592 = vadd.f32 %v223, %v496
  %v593 = vadd.f32 %v224, %v497
  %v594 = vadd.f32 %v225, %v498
  %v595 = vadd.f32 %v226, %v499
  %v596 = vadd.f32 %v227, %v500
  %v597 = vadd.f32 %v228, %v501
  %v598 = vadd.f32 %v229, %v502
  %v599 = vadd.f32 %v230, %v503
  %v600 = vadd.f32 %v231, %v504
  %v601 = vadd.f32 %v232, %v505
  %v602 = vadd.f32 %v233, %v506
  %v603 = vadd.f32 %v234, %v507
  %v604 = vadd.f32 %v235, %v508
  %v605 = vadd.f32 %v236, %v509
  %v606 = vadd.f32 %v237, %v510
  %v607 = vadd.f32 %v238, %v511
  %v608 = vadd.f32 %v239, %v512
  %v609 = vadd.f32 %v240, %v513
  %v610 = vadd.f32 %v241, %v514
  %v611 = vadd.f32 %v242, %v515
  %v612 = vadd.f32 %v243, %v516
  %v613 = vadd.f32 %v244, %v517
  %v614 = vadd.f32 %v245, %v518
  %v615 = vadd.f32 %v246, %v519
  %v616 = vadd.f32 %v247, %v520
  %v617 = vadd.f32 %v248, %v521
  %v618 = vadd.f32 %v249, %v522
  %v619 = vadd.f32 %v250, %v523
  %v620 = vadd.f32 %v251, %v524
  %v621 = vadd.f32 %v252, %v525
  %v622 = vadd.f32 %v253, %v526
  %v623 = vadd.f32 %v254, %v527
  %v624 = vadd.f32 %v255, %v528
  %v625 = vadd.f32 %v256, %v529
  %v626 = vadd.f32 %v257, %v530
  %v627 = vadd.f32 %v258, %v531
  %v628 = vadd.f32 %v259, %v532
  %v629 = vadd.f32 %v260, %v533
  %v630 = vadd.f32 %v261, %v534
  %v631 = vadd.f32 %v262, %v535
  %v632 = vadd.f32 %v263, %v536
  %v633 = vadd.f32 %v264, %v537
  %v634 = vadd.f32 %v265, %v538
  %v635 = vadd.f32 %v266, %v539
  %v636 = vadd.f32 %v267, %v540
  %v637 = vadd.f32 %v268, %v541
  %v638 = vadd.f32 %v269, %v542
  %v639 = vadd.f32 %v270, %v543
  %v640 = vadd.f32 %v271, %v544
  %v641 = vadd.f32 %v272, %v545
  %v642 = vadd.f32 %v273, %v546
  %v643 = vadd.f32 %v274, %v547
  %v644 = vadd.f32 %v275, %v548
  %v645 = vadd.f32 %v276, %v549
  %v646 = vadd.f32 %v277, %v550
  %v647 = vadd.f32 %v278, %v551
  %v648 = vadd.f32 %v279, %v552
  %v649 = vadd.f32 %v280, %v553
  %v650 = vadd.f32 %v281, %v554
  %v651 = vadd.f32 %v282, %v555
  %v652 = vadd.f32 %v283, %v556
  %v653 = vadd.f32 %v284, %v557
  %v654 = vadd.f32 %v285, %v558
  %v655 = vadd.f32 %v286, %v559
  %v656 = vadd.f32 %v287, %v560
  %v657 = vadd.f32 %v288, %v561
  %v658 = vadd.f32 %v289, %v562
  %v659 = vadd.f32 %v290, %v563
  %v660 = vadd.f32 %v291, %v564
  %v661 = vadd.f32 %v292, %v565
  %v662 = vadd.f32 %v293, %v566
  %v663 = vadd.f32 %v294, %v567
  %v664 = vadd.f32 %v568, %v569
  %v665 = vadd.f32 %v664, %v570
  %666 = vadd.xlane.f32.xlu0 %v665
  %v667 = vpop.xlane.xlu0 %666
  %v668 = vadd.f32 %v571, %v572
  %v669 = vadd.f32 %v668, %v573
  %670 = vadd.xlane.f32.xlu0 %v669
  %v671 = vpop.xlane.xlu0 %670
  %v672 = vadd.f32 %v574, %v575
  %v673 = vadd.f32 %v672, %v576
  %674 = vadd.xlane.f32.xlu0 %v673
  %v675 = vpop.xlane.xlu0 %674
  %v676 = vadd.f32 %v577, %v578
  %v677 = vadd.f32 %v676, %v579
  %678 = vadd.xlane.f32.xlu0 %v677
  %v679 = vpop.xlane.xlu0 %678
  %v680 = vadd.f32 %v580, %v581
  %v681 = vadd.f32 %v680, %v582
  %682 = vadd.xlane.f32.xlu0 %v681
  %v683 = vpop.xlane.xlu0 %682
  %v684 = vadd.f32 %v583, %v584
  %v685 = vadd.f32 %v684, %v585
  %686 = vadd.xlane.f32.xlu0 %v685
  %v687 = vpop.xlane.xlu0 %686
  %v688 = vadd.f32 %v586, %v587
  %v689 = vadd.f32 %v688, %v588
  %690 = vadd.xlane.f32.xlu0 %v689
  %v691 = vpop.xlane.xlu0 %690
  %v692 = vadd.f32 %v589, %v590
  %v693 = vadd.f32 %v692, %v591
  %694 = vadd.xlane.f32.xlu0 %v693
  %v695 = vpop.xlane.xlu0 %694
  %v696 = vadd.f32 %v592, %v593
  %v697 = vadd.f32 %v696, %v594
  %698 = vadd.xlane.f32.xlu0 %v697
  %v699 = vpop.xlane.xlu0 %698
  %v700 = vadd.f32 %v595, %v596
  %v701 = vadd.f32 %v700, %v597
  %702 = vadd.xlane.f32.xlu0 %v701
  %v703 = vpop.xlane.xlu0 %702
  %v704 = vadd.f32 %v598, %v599
  %v705 = vadd.f32 %v704, %v600
  %706 = vadd.xlane.f32.xlu0 %v705
  %v707 = vpop.xlane.xlu0 %706
  %v708 = vadd.f32 %v601, %v602
  %v709 = vadd.f32 %v708, %v603
  %710 = vadd.xlane.f32.xlu0 %v709
  %v711 = vpop.xlane.xlu0 %710
  %v712 = vadd.f32 %v604, %v605
  %v713 = vadd.f32 %v712, %v606
  %714 = vadd.xlane.f32.xlu0 %v713
  %v715 = vpop.xlane.xlu0 %714
  %v716 = vadd.f32 %v607, %v608
  %v717 = vadd.f32 %v716, %v609
  %718 = vadd.xlane.f32.xlu0 %v717
  %v719 = vpop.xlane.xlu0 %718
  %v720 = vadd.f32 %v610, %v611
  %v721 = vadd.f32 %v720, %v612
  %722 = vadd.xlane.f32.xlu0 %v721
  %v723 = vpop.xlane.xlu0 %722
  %v724 = vadd.f32 %v613, %v614
  %v725 = vadd.f32 %v724, %v615
  %726 = vadd.xlane.f32.xlu0 %v725
  %v727 = vpop.xlane.xlu0 %726
  %v728 = vadd.f32 %v616, %v617
  %v729 = vadd.f32 %v728, %v618
  %730 = vadd.xlane.f32.xlu0 %v729
  %v731 = vpop.xlane.xlu0 %730
  %v732 = vadd.f32 %v619, %v620
  %v733 = vadd.f32 %v732, %v621
  %734 = vadd.xlane.f32.xlu0 %v733
  %v735 = vpop.xlane.xlu0 %734
  %v736 = vadd.f32 %v622, %v623
  %v737 = vadd.f32 %v736, %v624
  %738 = vadd.xlane.f32.xlu0 %v737
  %v739 = vpop.xlane.xlu0 %738
  %v740 = vadd.f32 %v625, %v626
  %v741 = vadd.f32 %v740, %v627
  %742 = vadd.xlane.f32.xlu0 %v741
  %v743 = vpop.xlane.xlu0 %742
  %v744 = vadd.f32 %v628, %v629
  %v745 = vadd.f32 %v744, %v630
  %746 = vadd.xlane.f32.xlu0 %v745
  %v747 = vpop.xlane.xlu0 %746
  %v748 = vadd.f32 %v631, %v632
  %v749 = vadd.f32 %v748, %v633
  %750 = vadd.xlane.f32.xlu0 %v749
  %v751 = vpop.xlane.xlu0 %750
  %v752 = vadd.f32 %v634, %v635
  %v753 = vadd.f32 %v752, %v636
  %754 = vadd.xlane.f32.xlu0 %v753
  %v755 = vpop.xlane.xlu0 %754
  %v756 = vadd.f32 %v637, %v638
  %v757 = vadd.f32 %v756, %v639
  %758 = vadd.xlane.f32.xlu0 %v757
  %v759 = vpop.xlane.xlu0 %758
  %v760 = vadd.f32 %v640, %v641
  %v761 = vadd.f32 %v760, %v642
  %762 = vadd.xlane.f32.xlu0 %v761
  %v763 = vpop.xlane.xlu0 %762
  %v764 = vadd.f32 %v643, %v644
  %v765 = vadd.f32 %v764, %v645
  %766 = vadd.xlane.f32.xlu0 %v765
  %v767 = vpop.xlane.xlu0 %766
  %v768 = vadd.f32 %v646, %v647
  %v769 = vadd.f32 %v768, %v648
  %770 = vadd.xlane.f32.xlu0 %v769
  %v771 = vpop.xlane.xlu0 %770
  %v772 = vadd.f32 %v649, %v650
  %v773 = vadd.f32 %v772, %v651
  %774 = vadd.xlane.f32.xlu0 %v773
  %v775 = vpop.xlane.xlu0 %774
  %v776 = vadd.f32 %v652, %v653
  %v777 = vadd.f32 %v776, %v654
  %778 = vadd.xlane.f32.xlu0 %v777
  %v779 = vpop.xlane.xlu0 %778
  %v780 = vadd.f32 %v655, %v656
  %v781 = vadd.f32 %v780, %v657
  %782 = vadd.xlane.f32.xlu0 %v781
  %v783 = vpop.xlane.xlu0 %782
  %v784 = vadd.f32 %v658, %v659
  %v785 = vadd.f32 %v784, %v660
  %786 = vadd.xlane.f32.xlu0 %v785
  %v787 = vpop.xlane.xlu0 %786
  %v788 = vadd.f32 %v661, %v662
  %v789 = vadd.f32 %v788, %v663
  %790 = vadd.xlane.f32.xlu0 %v789
  %v791 = vpop.xlane.xlu0 %790
  %v792 = vmul.f32 %v667, 0.0026041667
  %v793 = vmul.f32 %v671, 0.0026041667
  %v794 = vmul.f32 %v675, 0.0026041667
  %v795 = vmul.f32 %v679, 0.0026041667
  %v796 = vmul.f32 %v683, 0.0026041667
  %v797 = vmul.f32 %v687, 0.0026041667
  %v798 = vmul.f32 %v691, 0.0026041667
  %v799 = vmul.f32 %v695, 0.0026041667
  %v800 = vmul.f32 %v699, 0.0026041667
  %v801 = vmul.f32 %v703, 0.0026041667
  %v802 = vmul.f32 %v707, 0.0026041667
  %v803 = vmul.f32 %v711, 0.0026041667
  %v804 = vmul.f32 %v715, 0.0026041667
  %v805 = vmul.f32 %v719, 0.0026041667
  %v806 = vmul.f32 %v723, 0.0026041667
  %v807 = vmul.f32 %v727, 0.0026041667
  %v808 = vmul.f32 %v731, 0.0026041667
  %v809 = vmul.f32 %v735, 0.0026041667
  %v810 = vmul.f32 %v739, 0.0026041667
  %v811 = vmul.f32 %v743, 0.0026041667
  %v812 = vmul.f32 %v747, 0.0026041667
  %v813 = vmul.f32 %v751, 0.0026041667
  %v814 = vmul.f32 %v755, 0.0026041667
  %v815 = vmul.f32 %v759, 0.0026041667
  %v816 = vmul.f32 %v763, 0.0026041667
  %v817 = vmul.f32 %v767, 0.0026041667
  %v818 = vmul.f32 %v771, 0.0026041667
  %v819 = vmul.f32 %v775, 0.0026041667
  %v820 = vmul.f32 %v779, 0.0026041667
  %v821 = vmul.f32 %v783, 0.0026041667
  %v822 = vmul.f32 %v787, 0.0026041667
  %v823 = vmul.f32 %v791, 0.0026041667
  %v824 = vmul.f32 %v568, %v568
  %v825 = vmul.f32 %v569, %v569
  %v826 = vmul.f32 %v570, %v570
  %v827 = vmul.f32 %v571, %v571
  %v828 = vmul.f32 %v572, %v572
  %v829 = vmul.f32 %v573, %v573
  %v830 = vmul.f32 %v574, %v574
  %v831 = vmul.f32 %v575, %v575
  %v832 = vmul.f32 %v576, %v576
  %v833 = vmul.f32 %v577, %v577
  %v834 = vmul.f32 %v578, %v578
  %v835 = vmul.f32 %v579, %v579
  %v836 = vmul.f32 %v580, %v580
  %v837 = vmul.f32 %v581, %v581
  %v838 = vmul.f32 %v582, %v582
  %v839 = vmul.f32 %v583, %v583
  %v840 = vmul.f32 %v584, %v584
  %v841 = vmul.f32 %v585, %v585
  %v842 = vmul.f32 %v586, %v586
  %v843 = vmul.f32 %v587, %v587
  %v844 = vmul.f32 %v588, %v588
  %v845 = vmul.f32 %v589, %v589
  %v846 = vmul.f32 %v590, %v590
  %v847 = vmul.f32 %v591, %v591
  %v848 = vmul.f32 %v592, %v592
  %v849 = vmul.f32 %v593, %v593
  %v850 = vmul.f32 %v594, %v594
  %v851 = vmul.f32 %v595, %v595
  %v852 = vmul.f32 %v596, %v596
  %v853 = vmul.f32 %v597, %v597
  %v854 = vmul.f32 %v598, %v598
  %v855 = vmul.f32 %v599, %v599
  %v856 = vmul.f32 %v600, %v600
  %v857 = vmul.f32 %v601, %v601
  %v858 = vmul.f32 %v602, %v602
  %v859 = vmul.f32 %v603, %v603
  %v860 = vmul.f32 %v604, %v604
  %v861 = vmul.f32 %v605, %v605
  %v862 = vmul.f32 %v606, %v606
  %v863 = vmul.f32 %v607, %v607
  %v864 = vmul.f32 %v608, %v608
  %v865 = vmul.f32 %v609, %v609
  %v866 = vmul.f32 %v610, %v610
  %v867 = vmul.f32 %v611, %v611
  %v868 = vmul.f32 %v612, %v612
  %v869 = vmul.f32 %v613, %v613
  %v870 = vmul.f32 %v614, %v614
  %v871 = vmul.f32 %v615, %v615
  %v872 = vmul.f32 %v616, %v616
  %v873 = vmul.f32 %v617, %v617
  %v874 = vmul.f32 %v618, %v618
  %v875 = vmul.f32 %v619, %v619
  %v876 = vmul.f32 %v620, %v620
  %v877 = vmul.f32 %v621, %v621
  %v878 = vmul.f32 %v622, %v622
  %v879 = vmul.f32 %v623, %v623
  %v880 = vmul.f32 %v624, %v624
  %v881 = vmul.f32 %v625, %v625
  %v882 = vmul.f32 %v626, %v626
  %v883 = vmul.f32 %v627, %v627
  %v884 = vmul.f32 %v628, %v628
  %v885 = vmul.f32 %v629, %v629
  %v886 = vmul.f32 %v630, %v630
  %v887 = vmul.f32 %v631, %v631
  %v888 = vmul.f32 %v632, %v632
  %v889 = vmul.f32 %v633, %v633
  %v890 = vmul.f32 %v634, %v634
  %v891 = vmul.f32 %v635, %v635
  %v892 = vmul.f32 %v636, %v636
  %v893 = vmul.f32 %v637, %v637
  %v894 = vmul.f32 %v638, %v638
  %v895 = vmul.f32 %v639, %v639
  %v896 = vmul.f32 %v640, %v640
  %v897 = vmul.f32 %v641, %v641
  %v898 = vmul.f32 %v642, %v642
  %v899 = vmul.f32 %v643, %v643
  %v900 = vmul.f32 %v644, %v644
  %v901 = vmul.f32 %v645, %v645
  %v902 = vmul.f32 %v646, %v646
  %v903 = vmul.f32 %v647, %v647
  %v904 = vmul.f32 %v648, %v648
  %v905 = vmul.f32 %v649, %v649
  %v906 = vmul.f32 %v650, %v650
  %v907 = vmul.f32 %v651, %v651
  %v908 = vmul.f32 %v652, %v652
  %v909 = vmul.f32 %v653, %v653
  %v910 = vmul.f32 %v654, %v654
  %v911 = vmul.f32 %v655, %v655
  %v912 = vmul.f32 %v656, %v656
  %v913 = vmul.f32 %v657, %v657
  %v914 = vmul.f32 %v658, %v658
  %v915 = vmul.f32 %v659, %v659
  %v916 = vmul.f32 %v660, %v660
  %v917 = vmul.f32 %v661, %v661
  %v918 = vmul.f32 %v662, %v662
  %v919 = vmul.f32 %v663, %v663
  %v920 = vadd.f32 %v824, %v825
  %v921 = vadd.f32 %v920, %v826
  %922 = vadd.xlane.f32.xlu0 %v921
  %v923 = vpop.xlane.xlu0 %922
  %v924 = vadd.f32 %v827, %v828
  %v925 = vadd.f32 %v924, %v829
  %926 = vadd.xlane.f32.xlu0 %v925
  %v927 = vpop.xlane.xlu0 %926
  %v928 = vadd.f32 %v830, %v831
  %v929 = vadd.f32 %v928, %v832
  %930 = vadd.xlane.f32.xlu0 %v929
  %v931 = vpop.xlane.xlu0 %930
  %v932 = vadd.f32 %v833, %v834
  %v933 = vadd.f32 %v932, %v835
  %934 = vadd.xlane.f32.xlu0 %v933
  %v935 = vpop.xlane.xlu0 %934
  %v936 = vadd.f32 %v836, %v837
  %v937 = vadd.f32 %v936, %v838
  %938 = vadd.xlane.f32.xlu0 %v937
  %v939 = vpop.xlane.xlu0 %938
  %v940 = vadd.f32 %v839, %v840
  %v941 = vadd.f32 %v940, %v841
  %942 = vadd.xlane.f32.xlu0 %v941
  %v943 = vpop.xlane.xlu0 %942
  %v944 = vadd.f32 %v842, %v843
  %v945 = vadd.f32 %v944, %v844
  %946 = vadd.xlane.f32.xlu0 %v945
  %v947 = vpop.xlane.xlu0 %946
  %v948 = vadd.f32 %v845, %v846
  %v949 = vadd.f32 %v948, %v847
  %950 = vadd.xlane.f32.xlu0 %v949
  %v951 = vpop.xlane.xlu0 %950
  %v952 = vadd.f32 %v848, %v849
  %v953 = vadd.f32 %v952, %v850
  %954 = vadd.xlane.f32.xlu0 %v953
  %v955 = vpop.xlane.xlu0 %954
  %v956 = vadd.f32 %v851, %v852
  %v957 = vadd.f32 %v956, %v853
  %958 = vadd.xlane.f32.xlu0 %v957
  %v959 = vpop.xlane.xlu0 %958
  %v960 = vadd.f32 %v854, %v855
  %v961 = vadd.f32 %v960, %v856
  %962 = vadd.xlane.f32.xlu0 %v961
  %v963 = vpop.xlane.xlu0 %962
  %v964 = vadd.f32 %v857, %v858
  %v965 = vadd.f32 %v964, %v859
  %966 = vadd.xlane.f32.xlu0 %v965
  %v967 = vpop.xlane.xlu0 %966
  %v968 = vadd.f32 %v860, %v861
  %v969 = vadd.f32 %v968, %v862
  %970 = vadd.xlane.f32.xlu0 %v969
  %v971 = vpop.xlane.xlu0 %970
  %v972 = vadd.f32 %v863, %v864
  %v973 = vadd.f32 %v972, %v865
  %974 = vadd.xlane.f32.xlu0 %v973
  %v975 = vpop.xlane.xlu0 %974
  %v976 = vadd.f32 %v866, %v867
  %v977 = vadd.f32 %v976, %v868
  %978 = vadd.xlane.f32.xlu0 %v977
  %v979 = vpop.xlane.xlu0 %978
  %v980 = vadd.f32 %v869, %v870
  %v981 = vadd.f32 %v980, %v871
  %982 = vadd.xlane.f32.xlu0 %v981
  %v983 = vpop.xlane.xlu0 %982
  %v984 = vadd.f32 %v872, %v873
  %v985 = vadd.f32 %v984, %v874
  %986 = vadd.xlane.f32.xlu0 %v985
  %v987 = vpop.xlane.xlu0 %986
  %v988 = vadd.f32 %v875, %v876
  %v989 = vadd.f32 %v988, %v877
  %990 = vadd.xlane.f32.xlu0 %v989
  %v991 = vpop.xlane.xlu0 %990
  %v992 = vadd.f32 %v878, %v879
  %v993 = vadd.f32 %v992, %v880
  %994 = vadd.xlane.f32.xlu0 %v993
  %v995 = vpop.xlane.xlu0 %994
  %v996 = vadd.f32 %v881, %v882
  %v997 = vadd.f32 %v996, %v883
  %998 = vadd.xlane.f32.xlu0 %v997
  %v999 = vpop.xlane.xlu0 %998
  %v1000 = vadd.f32 %v884, %v885
  %v1001 = vadd.f32 %v1000, %v886
  %1002 = vadd.xlane.f32.xlu0 %v1001
  %v1003 = vpop.xlane.xlu0 %1002
  %v1004 = vadd.f32 %v887, %v888
  %v1005 = vadd.f32 %v1004, %v889
  %1006 = vadd.xlane.f32.xlu0 %v1005
  %v1007 = vpop.xlane.xlu0 %1006
  %v1008 = vadd.f32 %v890, %v891
  %v1009 = vadd.f32 %v1008, %v892
  %1010 = vadd.xlane.f32.xlu0 %v1009
  %v1011 = vpop.xlane.xlu0 %1010
  %v1012 = vadd.f32 %v893, %v894
  %v1013 = vadd.f32 %v1012, %v895
  %1014 = vadd.xlane.f32.xlu0 %v1013
  %v1015 = vpop.xlane.xlu0 %1014
  %v1016 = vadd.f32 %v896, %v897
  %v1017 = vadd.f32 %v1016, %v898
  %1018 = vadd.xlane.f32.xlu0 %v1017
  %v1019 = vpop.xlane.xlu0 %1018
  %v1020 = vadd.f32 %v899, %v900
  %v1021 = vadd.f32 %v1020, %v901
  %1022 = vadd.xlane.f32.xlu0 %v1021
  %v1023 = vpop.xlane.xlu0 %1022
  %v1024 = vadd.f32 %v902, %v903
  %v1025 = vadd.f32 %v1024, %v904
  %1026 = vadd.xlane.f32.xlu0 %v1025
  %v1027 = vpop.xlane.xlu0 %1026
  %v1028 = vadd.f32 %v905, %v906
  %v1029 = vadd.f32 %v1028, %v907
  %1030 = vadd.xlane.f32.xlu0 %v1029
  %v1031 = vpop.xlane.xlu0 %1030
  %v1032 = vadd.f32 %v908, %v909
  %v1033 = vadd.f32 %v1032, %v910
  %1034 = vadd.xlane.f32.xlu0 %v1033
  %v1035 = vpop.xlane.xlu0 %1034
  %v1036 = vadd.f32 %v911, %v912
  %v1037 = vadd.f32 %v1036, %v913
  %1038 = vadd.xlane.f32.xlu0 %v1037
  %v1039 = vpop.xlane.xlu0 %1038
  %v1040 = vadd.f32 %v914, %v915
  %v1041 = vadd.f32 %v1040, %v916
  %1042 = vadd.xlane.f32.xlu0 %v1041
  %v1043 = vpop.xlane.xlu0 %1042
  %v1044 = vadd.f32 %v917, %v918
  %v1045 = vadd.f32 %v1044, %v919
  %1046 = vadd.xlane.f32.xlu0 %v1045
  %v1047 = vpop.xlane.xlu0 %1046
  %v1048 = vmul.f32 %v923, 0.0026041667
  %v1049 = vmul.f32 %v927, 0.0026041667
  %v1050 = vmul.f32 %v931, 0.0026041667
  %v1051 = vmul.f32 %v935, 0.0026041667
  %v1052 = vmul.f32 %v939, 0.0026041667
  %v1053 = vmul.f32 %v943, 0.0026041667
  %v1054 = vmul.f32 %v947, 0.0026041667
  %v1055 = vmul.f32 %v951, 0.0026041667
  %v1056 = vmul.f32 %v955, 0.0026041667
  %v1057 = vmul.f32 %v959, 0.0026041667
  %v1058 = vmul.f32 %v963, 0.0026041667
  %v1059 = vmul.f32 %v967, 0.0026041667
  %v1060 = vmul.f32 %v971, 0.0026041667
  %v1061 = vmul.f32 %v975, 0.0026041667
  %v1062 = vmul.f32 %v979, 0.0026041667
  %v1063 = vmul.f32 %v983, 0.0026041667
  %v1064 = vmul.f32 %v987, 0.0026041667
  %v1065 = vmul.f32 %v991, 0.0026041667
  %v1066 = vmul.f32 %v995, 0.0026041667
  %v1067 = vmul.f32 %v999, 0.0026041667
  %v1068 = vmul.f32 %v1003, 0.0026041667
  %v1069 = vmul.f32 %v1007, 0.0026041667
  %v1070 = vmul.f32 %v1011, 0.0026041667
  %v1071 = vmul.f32 %v1015, 0.0026041667
  %v1072 = vmul.f32 %v1019, 0.0026041667
  %v1073 = vmul.f32 %v1023, 0.0026041667
  %v1074 = vmul.f32 %v1027, 0.0026041667
  %v1075 = vmul.f32 %v1031, 0.0026041667
  %v1076 = vmul.f32 %v1035, 0.0026041667
  %v1077 = vmul.f32 %v1039, 0.0026041667
  %v1078 = vmul.f32 %v1043, 0.0026041667
  %v1079 = vmul.f32 %v1047, 0.0026041667
  %v1080 = vmul.f32 %v792, %v792
  %v1081 = vmul.f32 %v793, %v793
  %v1082 = vmul.f32 %v794, %v794
  %v1083 = vmul.f32 %v795, %v795
  %v1084 = vmul.f32 %v796, %v796
  %v1085 = vmul.f32 %v797, %v797
  %v1086 = vmul.f32 %v798, %v798
  %v1087 = vmul.f32 %v799, %v799
  %v1088 = vmul.f32 %v800, %v800
  %v1089 = vmul.f32 %v801, %v801
  %v1090 = vmul.f32 %v802, %v802
  %v1091 = vmul.f32 %v803, %v803
  %v1092 = vmul.f32 %v804, %v804
  %v1093 = vmul.f32 %v805, %v805
  %v1094 = vmul.f32 %v806, %v806
  %v1095 = vmul.f32 %v807, %v807
  %v1096 = vmul.f32 %v808, %v808
  %v1097 = vmul.f32 %v809, %v809
  %v1098 = vmul.f32 %v810, %v810
  %v1099 = vmul.f32 %v811, %v811
  %v1100 = vmul.f32 %v812, %v812
  %v1101 = vmul.f32 %v813, %v813
  %v1102 = vmul.f32 %v814, %v814
  %v1103 = vmul.f32 %v815, %v815
  %v1104 = vmul.f32 %v816, %v816
  %v1105 = vmul.f32 %v817, %v817
  %v1106 = vmul.f32 %v818, %v818
  %v1107 = vmul.f32 %v819, %v819
  %v1108 = vmul.f32 %v820, %v820
  %v1109 = vmul.f32 %v821, %v821
  %v1110 = vmul.f32 %v822, %v822
  %v1111 = vmul.f32 %v823, %v823
  %v1112 = vsub.f32 %v1048, %v1080
  %v1113 = vsub.f32 %v1049, %v1081
  %v1114 = vsub.f32 %v1050, %v1082
  %v1115 = vsub.f32 %v1051, %v1083
  %v1116 = vsub.f32 %v1052, %v1084
  %v1117 = vsub.f32 %v1053, %v1085
  %v1118 = vsub.f32 %v1054, %v1086
  %v1119 = vsub.f32 %v1055, %v1087
  %v1120 = vsub.f32 %v1056, %v1088
  %v1121 = vsub.f32 %v1057, %v1089
  %v1122 = vsub.f32 %v1058, %v1090
  %v1123 = vsub.f32 %v1059, %v1091
  %v1124 = vsub.f32 %v1060, %v1092
  %v1125 = vsub.f32 %v1061, %v1093
  %v1126 = vsub.f32 %v1062, %v1094
  %v1127 = vsub.f32 %v1063, %v1095
  %v1128 = vsub.f32 %v1064, %v1096
  %v1129 = vsub.f32 %v1065, %v1097
  %v1130 = vsub.f32 %v1066, %v1098
  %v1131 = vsub.f32 %v1067, %v1099
  %v1132 = vsub.f32 %v1068, %v1100
  %v1133 = vsub.f32 %v1069, %v1101
  %v1134 = vsub.f32 %v1070, %v1102
  %v1135 = vsub.f32 %v1071, %v1103
  %v1136 = vsub.f32 %v1072, %v1104
  %v1137 = vsub.f32 %v1073, %v1105
  %v1138 = vsub.f32 %v1074, %v1106
  %v1139 = vsub.f32 %v1075, %v1107
  %v1140 = vsub.f32 %v1076, %v1108
  %v1141 = vsub.f32 %v1077, %v1109
  %v1142 = vsub.f32 %v1078, %v1110
  %v1143 = vsub.f32 %v1079, %v1111
  %v1144 = vsub.f32 %v568, %v792
  %v1145 = vsub.f32 %v569, %v792
  %v1146 = vsub.f32 %v570, %v792
  %v1147 = vsub.f32 %v571, %v793
  %v1148 = vsub.f32 %v572, %v793
  %v1149 = vsub.f32 %v573, %v793
  %v1150 = vsub.f32 %v574, %v794
  %v1151 = vsub.f32 %v575, %v794
  %v1152 = vsub.f32 %v576, %v794
  %v1153 = vsub.f32 %v577, %v795
  %v1154 = vsub.f32 %v578, %v795
  %v1155 = vsub.f32 %v579, %v795
  %v1156 = vsub.f32 %v580, %v796
  %v1157 = vsub.f32 %v581, %v796
  %v1158 = vsub.f32 %v582, %v796
  %v1159 = vsub.f32 %v583, %v797
  %v1160 = vsub.f32 %v584, %v797
  %v1161 = vsub.f32 %v585, %v797
  %v1162 = vsub.f32 %v586, %v798
  %v1163 = vsub.f32 %v587, %v798
  %v1164 = vsub.f32 %v588, %v798
  %v1165 = vsub.f32 %v589, %v799
  %v1166 = vsub.f32 %v590, %v799
  %v1167 = vsub.f32 %v591, %v799
  %v1168 = vsub.f32 %v592, %v800
  %v1169 = vsub.f32 %v593, %v800
  %v1170 = vsub.f32 %v594, %v800
  %v1171 = vsub.f32 %v595, %v801
  %v1172 = vsub.f32 %v596, %v801
  %v1173 = vsub.f32 %v597, %v801
  %v1174 = vsub.f32 %v598, %v802
  %v1175 = vsub.f32 %v599, %v802
  %v1176 = vsub.f32 %v600, %v802
  %v1177 = vsub.f32 %v601, %v803
  %v1178 = vsub.f32 %v602, %v803
  %v1179 = vsub.f32 %v603, %v803
  %v1180 = vsub.f32 %v604, %v804
  %v1181 = vsub.f32 %v605, %v804
  %v1182 = vsub.f32 %v606, %v804
  %v1183 = vsub.f32 %v607, %v805
  %v1184 = vsub.f32 %v608, %v805
  %v1185 = vsub.f32 %v609, %v805
  %v1186 = vsub.f32 %v610, %v806
  %v1187 = vsub.f32 %v611, %v806
  %v1188 = vsub.f32 %v612, %v806
  %v1189 = vsub.f32 %v613, %v807
  %v1190 = vsub.f32 %v614, %v807
  %v1191 = vsub.f32 %v615, %v807
  %v1192 = vsub.f32 %v616, %v808
  %v1193 = vsub.f32 %v617, %v808
  %v1194 = vsub.f32 %v618, %v808
  %v1195 = vsub.f32 %v619, %v809
  %v1196 = vsub.f32 %v620, %v809
  %v1197 = vsub.f32 %v621, %v809
  %v1198 = vsub.f32 %v622, %v810
  %v1199 = vsub.f32 %v623, %v810
  %v1200 = vsub.f32 %v624, %v810
  %v1201 = vsub.f32 %v625, %v811
  %v1202 = vsub.f32 %v626, %v811
  %v1203 = vsub.f32 %v627, %v811
  %v1204 = vsub.f32 %v628, %v812
  %v1205 = vsub.f32 %v629, %v812
  %v1206 = vsub.f32 %v630, %v812
  %v1207 = vsub.f32 %v631, %v813
  %v1208 = vsub.f32 %v632, %v813
  %v1209 = vsub.f32 %v633, %v813
  %v1210 = vsub.f32 %v634, %v814
  %v1211 = vsub.f32 %v635, %v814
  %v1212 = vsub.f32 %v636, %v814
  %v1213 = vsub.f32 %v637, %v815
  %v1214 = vsub.f32 %v638, %v815
  %v1215 = vsub.f32 %v639, %v815
  %v1216 = vsub.f32 %v640, %v816
  %v1217 = vsub.f32 %v641, %v816
  %v1218 = vsub.f32 %v642, %v816
  %v1219 = vsub.f32 %v643, %v817
  %v1220 = vsub.f32 %v644, %v817
  %v1221 = vsub.f32 %v645, %v817
  %v1222 = vsub.f32 %v646, %v818
  %v1223 = vsub.f32 %v647, %v818
  %v1224 = vsub.f32 %v648, %v818
  %v1225 = vsub.f32 %v649, %v819
  %v1226 = vsub.f32 %v650, %v819
  %v1227 = vsub.f32 %v651, %v819
  %v1228 = vsub.f32 %v652, %v820
  %v1229 = vsub.f32 %v653, %v820
  %v1230 = vsub.f32 %v654, %v820
  %v1231 = vsub.f32 %v655, %v821
  %v1232 = vsub.f32 %v656, %v821
  %v1233 = vsub.f32 %v657, %v821
  %v1234 = vsub.f32 %v658, %v822
  %v1235 = vsub.f32 %v659, %v822
  %v1236 = vsub.f32 %v660, %v822
  %v1237 = vsub.f32 %v661, %v823
  %v1238 = vsub.f32 %v662, %v823
  %v1239 = vsub.f32 %v663, %v823
  %v1240 = vadd.f32 %v1112, 1e-05
  %v1241 = vadd.f32 %v1113, 1e-05
  %v1242 = vadd.f32 %v1114, 1e-05
  %v1243 = vadd.f32 %v1115, 1e-05
  %v1244 = vadd.f32 %v1116, 1e-05
  %v1245 = vadd.f32 %v1117, 1e-05
  %v1246 = vadd.f32 %v1118, 1e-05
  %v1247 = vadd.f32 %v1119, 1e-05
  %v1248 = vadd.f32 %v1120, 1e-05
  %v1249 = vadd.f32 %v1121, 1e-05
  %v1250 = vadd.f32 %v1122, 1e-05
  %v1251 = vadd.f32 %v1123, 1e-05
  %v1252 = vadd.f32 %v1124, 1e-05
  %v1253 = vadd.f32 %v1125, 1e-05
  %v1254 = vadd.f32 %v1126, 1e-05
  %v1255 = vadd.f32 %v1127, 1e-05
  %v1256 = vadd.f32 %v1128, 1e-05
  %v1257 = vadd.f32 %v1129, 1e-05
  %v1258 = vadd.f32 %v1130, 1e-05
  %v1259 = vadd.f32 %v1131, 1e-05
  %v1260 = vadd.f32 %v1132, 1e-05
  %v1261 = vadd.f32 %v1133, 1e-05
  %v1262 = vadd.f32 %v1134, 1e-05
  %v1263 = vadd.f32 %v1135, 1e-05
  %v1264 = vadd.f32 %v1136, 1e-05
  %v1265 = vadd.f32 %v1137, 1e-05
  %v1266 = vadd.f32 %v1138, 1e-05
  %v1267 = vadd.f32 %v1139, 1e-05
  %v1268 = vadd.f32 %v1140, 1e-05
  %v1269 = vadd.f32 %v1141, 1e-05
  %v1270 = vadd.f32 %v1142, 1e-05
  %v1271 = vadd.f32 %v1143, 1e-05
  %v1272 = vrsqrt.pop %v1240
  %v1273 = vrsqrt.pop %v1241
  %v1274 = vrsqrt.pop %v1242
  %v1275 = vrsqrt.pop %v1243
  %v1276 = vrsqrt.pop %v1244
  %v1277 = vrsqrt.pop %v1245
  %v1278 = vrsqrt.pop %v1246
  %v1279 = vrsqrt.pop %v1247
  %v1280 = vrsqrt.pop %v1248
  %v1281 = vrsqrt.pop %v1249
  %v1282 = vrsqrt.pop %v1250
  %v1283 = vrsqrt.pop %v1251
  %v1284 = vrsqrt.pop %v1252
  %v1285 = vrsqrt.pop %v1253
  %v1286 = vrsqrt.pop %v1254
  %v1287 = vrsqrt.pop %v1255
  %v1288 = vrsqrt.pop %v1256
  %v1289 = vrsqrt.pop %v1257
  %v1290 = vrsqrt.pop %v1258
  %v1291 = vrsqrt.pop %v1259
  %v1292 = vrsqrt.pop %v1260
  %v1293 = vrsqrt.pop %v1261
  %v1294 = vrsqrt.pop %v1262
  %v1295 = vrsqrt.pop %v1263
  %v1296 = vrsqrt.pop %v1264
  %v1297 = vrsqrt.pop %v1265
  %v1298 = vrsqrt.pop %v1266
  %v1299 = vrsqrt.pop %v1267
  %v1300 = vrsqrt.pop %v1268
  %v1301 = vrsqrt.pop %v1269
  %v1302 = vrsqrt.pop %v1270
  %v1303 = vrsqrt.pop %v1271
  %v1304 = vmul.f32 %v1144, %v1272
  %v1305 = vmul.f32 %v1145, %v1272
  %v1306 = vmul.f32 %v1146, %v1272
  %v1307 = vmul.f32 %v1147, %v1273
  %v1308 = vmul.f32 %v1148, %v1273
  %v1309 = vmul.f32 %v1149, %v1273
  %v1310 = vmul.f32 %v1150, %v1274
  %v1311 = vmul.f32 %v1151, %v1274
  %v1312 = vmul.f32 %v1152, %v1274
  %v1313 = vmul.f32 %v1153, %v1275
  %v1314 = vmul.f32 %v1154, %v1275
  %v1315 = vmul.f32 %v1155, %v1275
  %v1316 = vmul.f32 %v1156, %v1276
  %v1317 = vmul.f32 %v1157, %v1276
  %v1318 = vmul.f32 %v1158, %v1276
  %v1319 = vmul.f32 %v1159, %v1277
  %v1320 = vmul.f32 %v1160, %v1277
  %v1321 = vmul.f32 %v1161, %v1277
  %v1322 = vmul.f32 %v1162, %v1278
  %v1323 = vmul.f32 %v1163, %v1278
  %v1324 = vmul.f32 %v1164, %v1278
  %v1325 = vmul.f32 %v1165, %v1279
  %v1326 = vmul.f32 %v1166, %v1279
  %v1327 = vmul.f32 %v1167, %v1279
  %v1328 = vmul.f32 %v1168, %v1280
  %v1329 = vmul.f32 %v1169, %v1280
  %v1330 = vmul.f32 %v1170, %v1280
  %v1331 = vmul.f32 %v1171, %v1281
  %v1332 = vmul.f32 %v1172, %v1281
  %v1333 = vmul.f32 %v1173, %v1281
  %v1334 = vmul.f32 %v1174, %v1282
  %v1335 = vmul.f32 %v1175, %v1282
  %v1336 = vmul.f32 %v1176, %v1282
  %v1337 = vmul.f32 %v1177, %v1283
  %v1338 = vmul.f32 %v1178, %v1283
  %v1339 = vmul.f32 %v1179, %v1283
  %v1340 = vmul.f32 %v1180, %v1284
  %v1341 = vmul.f32 %v1181, %v1284
  %v1342 = vmul.f32 %v1182, %v1284
  %v1343 = vmul.f32 %v1183, %v1285
  %v1344 = vmul.f32 %v1184, %v1285
  %v1345 = vmul.f32 %v1185, %v1285
  %v1346 = vmul.f32 %v1186, %v1286
  %v1347 = vmul.f32 %v1187, %v1286
  %v1348 = vmul.f32 %v1188, %v1286
  %v1349 = vmul.f32 %v1189, %v1287
  %v1350 = vmul.f32 %v1190, %v1287
  %v1351 = vmul.f32 %v1191, %v1287
  %v1352 = vmul.f32 %v1192, %v1288
  %v1353 = vmul.f32 %v1193, %v1288
  %v1354 = vmul.f32 %v1194, %v1288
  %v1355 = vmul.f32 %v1195, %v1289
  %v1356 = vmul.f32 %v1196, %v1289
  %v1357 = vmul.f32 %v1197, %v1289
  %v1358 = vmul.f32 %v1198, %v1290
  %v1359 = vmul.f32 %v1199, %v1290
  %v1360 = vmul.f32 %v1200, %v1290
  %v1361 = vmul.f32 %v1201, %v1291
  %v1362 = vmul.f32 %v1202, %v1291
  %v1363 = vmul.f32 %v1203, %v1291
  %v1364 = vmul.f32 %v1204, %v1292
  %v1365 = vmul.f32 %v1205, %v1292
  %v1366 = vmul.f32 %v1206, %v1292
  %v1367 = vmul.f32 %v1207, %v1293
  %v1368 = vmul.f32 %v1208, %v1293
  %v1369 = vmul.f32 %v1209, %v1293
  %v1370 = vmul.f32 %v1210, %v1294
  %v1371 = vmul.f32 %v1211, %v1294
  %v1372 = vmul.f32 %v1212, %v1294
  %v1373 = vmul.f32 %v1213, %v1295
  %v1374 = vmul.f32 %v1214, %v1295
  %v1375 = vmul.f32 %v1215, %v1295
  %v1376 = vmul.f32 %v1216, %v1296
  %v1377 = vmul.f32 %v1217, %v1296
  %v1378 = vmul.f32 %v1218, %v1296
  %v1379 = vmul.f32 %v1219, %v1297
  %v1380 = vmul.f32 %v1220, %v1297
  %v1381 = vmul.f32 %v1221, %v1297
  %v1382 = vmul.f32 %v1222, %v1298
  %v1383 = vmul.f32 %v1223, %v1298
  %v1384 = vmul.f32 %v1224, %v1298
  %v1385 = vmul.f32 %v1225, %v1299
  %v1386 = vmul.f32 %v1226, %v1299
  %v1387 = vmul.f32 %v1227, %v1299
  %v1388 = vmul.f32 %v1228, %v1300
  %v1389 = vmul.f32 %v1229, %v1300
  %v1390 = vmul.f32 %v1230, %v1300
  %v1391 = vmul.f32 %v1231, %v1301
  %v1392 = vmul.f32 %v1232, %v1301
  %v1393 = vmul.f32 %v1233, %v1301
  %v1394 = vmul.f32 %v1234, %v1302
  %v1395 = vmul.f32 %v1235, %v1302
  %v1396 = vmul.f32 %v1236, %v1302
  %v1397 = vmul.f32 %v1237, %v1303
  %v1398 = vmul.f32 %v1238, %v1303
  %v1399 = vmul.f32 %v1239, %v1303
  %v1400 = vld [vmem:[%s4] sm:$0x7]
  %v1402 = vlaneseq
  %v1403 = vshrl.u32 %v1402, 7
  %v1404 = vsub.s32 0, %v1403
  %v1405 = vrot.slane %v1400, %v1404
  %v1406 = vlaneseq
  %v1407 = vshrl.u32 %v1406, 7
  %v1408 = vsub.s32 1, %v1407
  %v1409 = vrot.slane %v1400, %v1408
  %v1410 = vlaneseq
  %v1411 = vshrl.u32 %v1410, 7
  %v1412 = vsub.s32 2, %v1411
  %v1413 = vrot.slane %v1400, %v1412
  %v1417 = vmul.f32 %v1304, %v1405
  %v1418 = vmul.f32 %v1305, %v1409
  %v1419 = vmul.f32 %v1306, %v1413
  %v1420 = vmul.f32 %v1307, %v1405
  %v1421 = vmul.f32 %v1308, %v1409
  %v1422 = vmul.f32 %v1309, %v1413
  %v1423 = vmul.f32 %v1310, %v1405
  %v1424 = vmul.f32 %v1311, %v1409
  %v1425 = vmul.f32 %v1312, %v1413
  %v1426 = vmul.f32 %v1313, %v1405
  %v1427 = vmul.f32 %v1314, %v1409
  %v1428 = vmul.f32 %v1315, %v1413
  %v1429 = vmul.f32 %v1316, %v1405
  %v1430 = vmul.f32 %v1317, %v1409
  %v1431 = vmul.f32 %v1318, %v1413
  %v1432 = vmul.f32 %v1319, %v1405
  %v1433 = vmul.f32 %v1320, %v1409
  %v1434 = vmul.f32 %v1321, %v1413
  %v1435 = vmul.f32 %v1322, %v1405
  %v1436 = vmul.f32 %v1323, %v1409
  %v1437 = vmul.f32 %v1324, %v1413
  %v1438 = vmul.f32 %v1325, %v1405
  %v1439 = vmul.f32 %v1326, %v1409
  %v1440 = vmul.f32 %v1327, %v1413
  %v1441 = vmul.f32 %v1328, %v1405
  %v1442 = vmul.f32 %v1329, %v1409
  %v1443 = vmul.f32 %v1330, %v1413
  %v1444 = vmul.f32 %v1331, %v1405
  %v1445 = vmul.f32 %v1332, %v1409
  %v1446 = vmul.f32 %v1333, %v1413
  %v1447 = vmul.f32 %v1334, %v1405
  %v1448 = vmul.f32 %v1335, %v1409
  %v1449 = vmul.f32 %v1336, %v1413
  %v1450 = vmul.f32 %v1337, %v1405
  %v1451 = vmul.f32 %v1338, %v1409
  %v1452 = vmul.f32 %v1339, %v1413
  %v1453 = vmul.f32 %v1340, %v1405
  %v1454 = vmul.f32 %v1341, %v1409
  %v1455 = vmul.f32 %v1342, %v1413
  %v1456 = vmul.f32 %v1343, %v1405
  %v1457 = vmul.f32 %v1344, %v1409
  %v1458 = vmul.f32 %v1345, %v1413
  %v1459 = vmul.f32 %v1346, %v1405
  %v1460 = vmul.f32 %v1347, %v1409
  %v1461 = vmul.f32 %v1348, %v1413
  %v1462 = vmul.f32 %v1349, %v1405
  %v1463 = vmul.f32 %v1350, %v1409
  %v1464 = vmul.f32 %v1351, %v1413
  %v1465 = vmul.f32 %v1352, %v1405
  %v1466 = vmul.f32 %v1353, %v1409
  %v1467 = vmul.f32 %v1354, %v1413
  %v1468 = vmul.f32 %v1355, %v1405
  %v1469 = vmul.f32 %v1356, %v1409
  %v1470 = vmul.f32 %v1357, %v1413
  %v1471 = vmul.f32 %v1358, %v1405
  %v1472 = vmul.f32 %v1359, %v1409
  %v1473 = vmul.f32 %v1360, %v1413
  %v1474 = vmul.f32 %v1361, %v1405
  %v1475 = vmul.f32 %v1362, %v1409
  %v1476 = vmul.f32 %v1363, %v1413
  %v1477 = vmul.f32 %v1364, %v1405
  %v1478 = vmul.f32 %v1365, %v1409
  %v1479 = vmul.f32 %v1366, %v1413
  %v1480 = vmul.f32 %v1367, %v1405
  %v1481 = vmul.f32 %v1368, %v1409
  %v1482 = vmul.f32 %v1369, %v1413
  %v1483 = vmul.f32 %v1370, %v1405
  %v1484 = vmul.f32 %v1371, %v1409
  %v1485 = vmul.f32 %v1372, %v1413
  %v1486 = vmul.f32 %v1373, %v1405
  %v1487 = vmul.f32 %v1374, %v1409
  %v1488 = vmul.f32 %v1375, %v1413
  %v1489 = vmul.f32 %v1376, %v1405
  %v1490 = vmul.f32 %v1377, %v1409
  %v1491 = vmul.f32 %v1378, %v1413
  %v1492 = vmul.f32 %v1379, %v1405
  %v1493 = vmul.f32 %v1380, %v1409
  %v1494 = vmul.f32 %v1381, %v1413
  %v1495 = vmul.f32 %v1382, %v1405
  %v1496 = vmul.f32 %v1383, %v1409
  %v1497 = vmul.f32 %v1384, %v1413
  %v1498 = vmul.f32 %v1385, %v1405
  %v1499 = vmul.f32 %v1386, %v1409
  %v1500 = vmul.f32 %v1387, %v1413
  %v1501 = vmul.f32 %v1388, %v1405
  %v1502 = vmul.f32 %v1389, %v1409
  %v1503 = vmul.f32 %v1390, %v1413
  %v1504 = vmul.f32 %v1391, %v1405
  %v1505 = vmul.f32 %v1392, %v1409
  %v1506 = vmul.f32 %v1393, %v1413
  %v1507 = vmul.f32 %v1394, %v1405
  %v1508 = vmul.f32 %v1395, %v1409
  %v1509 = vmul.f32 %v1396, %v1413
  %v1510 = vmul.f32 %v1397, %v1405
  %v1511 = vmul.f32 %v1398, %v1409
  %v1512 = vmul.f32 %v1399, %v1413
  %v1513 = vld [vmem:[%s5] sm:$0x7]
  %v1515 = vlaneseq
  %v1516 = vshrl.u32 %v1515, 7
  %v1517 = vsub.s32 0, %v1516
  %v1518 = vrot.slane %v1513, %v1517
  %v1519 = vlaneseq
  %v1520 = vshrl.u32 %v1519, 7
  %v1521 = vsub.s32 1, %v1520
  %v1522 = vrot.slane %v1513, %v1521
  %v1523 = vlaneseq
  %v1524 = vshrl.u32 %v1523, 7
  %v1525 = vsub.s32 2, %v1524
  %v1526 = vrot.slane %v1513, %v1525
  %v1530 = vadd.f32 %v1417, %v1518
  %v1531 = vadd.f32 %v1418, %v1522
  %v1532 = vadd.f32 %v1419, %v1526
  %v1533 = vadd.f32 %v1420, %v1518
  %v1534 = vadd.f32 %v1421, %v1522
  %v1535 = vadd.f32 %v1422, %v1526
  %v1536 = vadd.f32 %v1423, %v1518
  %v1537 = vadd.f32 %v1424, %v1522
  %v1538 = vadd.f32 %v1425, %v1526
  %v1539 = vadd.f32 %v1426, %v1518
  %v1540 = vadd.f32 %v1427, %v1522
  %v1541 = vadd.f32 %v1428, %v1526
  %v1542 = vadd.f32 %v1429, %v1518
  %v1543 = vadd.f32 %v1430, %v1522
  %v1544 = vadd.f32 %v1431, %v1526
  %v1545 = vadd.f32 %v1432, %v1518
  %v1546 = vadd.f32 %v1433, %v1522
  %v1547 = vadd.f32 %v1434, %v1526
  %v1548 = vadd.f32 %v1435, %v1518
  %v1549 = vadd.f32 %v1436, %v1522
  %v1550 = vadd.f32 %v1437, %v1526
  %v1551 = vadd.f32 %v1438, %v1518
  %v1552 = vadd.f32 %v1439, %v1522
  %v1553 = vadd.f32 %v1440, %v1526
  %v1554 = vadd.f32 %v1441, %v1518
  %v1555 = vadd.f32 %v1442, %v1522
  %v1556 = vadd.f32 %v1443, %v1526
  %v1557 = vadd.f32 %v1444, %v1518
  %v1558 = vadd.f32 %v1445, %v1522
  %v1559 = vadd.f32 %v1446, %v1526
  %v1560 = vadd.f32 %v1447, %v1518
  %v1561 = vadd.f32 %v1448, %v1522
  %v1562 = vadd.f32 %v1449, %v1526
  %v1563 = vadd.f32 %v1450, %v1518
  %v1564 = vadd.f32 %v1451, %v1522
  %v1565 = vadd.f32 %v1452, %v1526
  %v1566 = vadd.f32 %v1453, %v1518
  %v1567 = vadd.f32 %v1454, %v1522
  %v1568 = vadd.f32 %v1455, %v1526
  %v1569 = vadd.f32 %v1456, %v1518
  %v1570 = vadd.f32 %v1457, %v1522
  %v1571 = vadd.f32 %v1458, %v1526
  %v1572 = vadd.f32 %v1459, %v1518
  %v1573 = vadd.f32 %v1460, %v1522
  %v1574 = vadd.f32 %v1461, %v1526
  %v1575 = vadd.f32 %v1462, %v1518
  %v1576 = vadd.f32 %v1463, %v1522
  %v1577 = vadd.f32 %v1464, %v1526
  %v1578 = vadd.f32 %v1465, %v1518
  %v1579 = vadd.f32 %v1466, %v1522
  %v1580 = vadd.f32 %v1467, %v1526
  %v1581 = vadd.f32 %v1468, %v1518
  %v1582 = vadd.f32 %v1469, %v1522
  %v1583 = vadd.f32 %v1470, %v1526
  %v1584 = vadd.f32 %v1471, %v1518
  %v1585 = vadd.f32 %v1472, %v1522
  %v1586 = vadd.f32 %v1473, %v1526
  %v1587 = vadd.f32 %v1474, %v1518
  %v1588 = vadd.f32 %v1475, %v1522
  %v1589 = vadd.f32 %v1476, %v1526
  %v1590 = vadd.f32 %v1477, %v1518
  %v1591 = vadd.f32 %v1478, %v1522
  %v1592 = vadd.f32 %v1479, %v1526
  %v1593 = vadd.f32 %v1480, %v1518
  %v1594 = vadd.f32 %v1481, %v1522
  %v1595 = vadd.f32 %v1482, %v1526
  %v1596 = vadd.f32 %v1483, %v1518
  %v1597 = vadd.f32 %v1484, %v1522
  %v1598 = vadd.f32 %v1485, %v1526
  %v1599 = vadd.f32 %v1486, %v1518
  %v1600 = vadd.f32 %v1487, %v1522
  %v1601 = vadd.f32 %v1488, %v1526
  %v1602 = vadd.f32 %v1489, %v1518
  %v1603 = vadd.f32 %v1490, %v1522
  %v1604 = vadd.f32 %v1491, %v1526
  %v1605 = vadd.f32 %v1492, %v1518
  %v1606 = vadd.f32 %v1493, %v1522
  %v1607 = vadd.f32 %v1494, %v1526
  %v1608 = vadd.f32 %v1495, %v1518
  %v1609 = vadd.f32 %v1496, %v1522
  %v1610 = vadd.f32 %v1497, %v1526
  %v1611 = vadd.f32 %v1498, %v1518
  %v1612 = vadd.f32 %v1499, %v1522
  %v1613 = vadd.f32 %v1500, %v1526
  %v1614 = vadd.f32 %v1501, %v1518
  %v1615 = vadd.f32 %v1502, %v1522
  %v1616 = vadd.f32 %v1503, %v1526
  %v1617 = vadd.f32 %v1504, %v1518
  %v1618 = vadd.f32 %v1505, %v1522
  %v1619 = vadd.f32 %v1506, %v1526
  %v1620 = vadd.f32 %v1507, %v1518
  %v1621 = vadd.f32 %v1508, %v1522
  %v1622 = vadd.f32 %v1509, %v1526
  %v1623 = vadd.f32 %v1510, %v1518
  %v1624 = vadd.f32 %v1511, %v1522
  %v1625 = vadd.f32 %v1512, %v1526
  %1626 = vst [vmem:[%s6] sm:$0xff] %v1530
  %1627 = vst [vmem:[%s6 + $0x8] sm:$0xff] %v1531
  %1628 = vst [vmem:[%s6 + $0x10] sm:$0xff] %v1532
  %1629 = vst [vmem:[%s6 + $0x18] sm:$0xff] %v1533
  %1630 = vst [vmem:[%s6 + $0x20] sm:$0xff] %v1534
  %1631 = vst [vmem:[%s6 + $0x28] sm:$0xff] %v1535
  %1632 = vst [vmem:[%s6 + $0x30] sm:$0xff] %v1536
  %1633 = vst [vmem:[%s6 + $0x38] sm:$0xff] %v1537
  %1634 = vst [vmem:[%s6 + $0x40] sm:$0xff] %v1538
  %1635 = vst [vmem:[%s6 + $0x48] sm:$0xff] %v1539
  %1636 = vst [vmem:[%s6 + $0x50] sm:$0xff] %v1540
  %1637 = vst [vmem:[%s6 + $0x58] sm:$0xff] %v1541
  %1638 = vst [vmem:[%s6 + $0x60] sm:$0xff] %v1542
  %1639 = vst [vmem:[%s6 + $0x68] sm:$0xff] %v1543
  %1640 = vst [vmem:[%s6 + $0x70] sm:$0xff] %v1544
  %1641 = vst [vmem:[%s6 + $0x78] sm:$0xff] %v1545
  %1642 = vst [vmem:[%s6 + $0x80] sm:$0xff] %v1546
  %1643 = vst [vmem:[%s6 + $0x88] sm:$0xff] %v1547
  %1644 = vst [vmem:[%s6 + $0x90] sm:$0xff] %v1548
  %1645 = vst [vmem:[%s6 + $0x98] sm:$0xff] %v1549
  %1646 = vst [vmem:[%s6 + $0xa0] sm:$0xff] %v1550
  %1647 = vst [vmem:[%s6 + $0xa8] sm:$0xff] %v1551
  %1648 = vst [vmem:[%s6 + $0xb0] sm:$0xff] %v1552
  %1649 = vst [vmem:[%s6 + $0xb8] sm:$0xff] %v1553
  %1650 = vst [vmem:[%s6 + $0xc0] sm:$0xff] %v1554
  %1651 = vst [vmem:[%s6 + $0xc8] sm:$0xff] %v1555
  %1652 = vst [vmem:[%s6 + $0xd0] sm:$0xff] %v1556
  %1653 = vst [vmem:[%s6 + $0xd8] sm:$0xff] %v1557
  %1654 = vst [vmem:[%s6 + $0xe0] sm:$0xff] %v1558
  %1655 = vst [vmem:[%s6 + $0xe8] sm:$0xff] %v1559
  %1656 = vst [vmem:[%s6 + $0xf0] sm:$0xff] %v1560
  %1657 = vst [vmem:[%s6 + $0xf8] sm:$0xff] %v1561
  %1658 = vst [vmem:[%s6 + $0x100] sm:$0xff] %v1562
  %1659 = vst [vmem:[%s6 + $0x108] sm:$0xff] %v1563
  %1660 = vst [vmem:[%s6 + $0x110] sm:$0xff] %v1564
  %1661 = vst [vmem:[%s6 + $0x118] sm:$0xff] %v1565
  %1662 = vst [vmem:[%s6 + $0x120] sm:$0xff] %v1566
  %1663 = vst [vmem:[%s6 + $0x128] sm:$0xff] %v1567
  %1664 = vst [vmem:[%s6 + $0x130] sm:$0xff] %v1568
  %1665 = vst [vmem:[%s6 + $0x138] sm:$0xff] %v1569
  %1666 = vst [vmem:[%s6 + $0x140] sm:$0xff] %v1570
  %1667 = vst [vmem:[%s6 + $0x148] sm:$0xff] %v1571
  %1668 = vst [vmem:[%s6 + $0x150] sm:$0xff] %v1572
  %1669 = vst [vmem:[%s6 + $0x158] sm:$0xff] %v1573
  %1670 = vst [vmem:[%s6 + $0x160] sm:$0xff] %v1574
  %1671 = vst [vmem:[%s6 + $0x168] sm:$0xff] %v1575
  %1672 = vst [vmem:[%s6 + $0x170] sm:$0xff] %v1576
  %1673 = vst [vmem:[%s6 + $0x178] sm:$0xff] %v1577
  %1674 = vst [vmem:[%s6 + $0x180] sm:$0xff] %v1578
  %1675 = vst [vmem:[%s6 + $0x188] sm:$0xff] %v1579
  %1676 = vst [vmem:[%s6 + $0x190] sm:$0xff] %v1580
  %1677 = vst [vmem:[%s6 + $0x198] sm:$0xff] %v1581
  %1678 = vst [vmem:[%s6 + $0x1a0] sm:$0xff] %v1582
  %1679 = vst [vmem:[%s6 + $0x1a8] sm:$0xff] %v1583
  %1680 = vst [vmem:[%s6 + $0x1b0] sm:$0xff] %v1584
  %1681 = vst [vmem:[%s6 + $0x1b8] sm:$0xff] %v1585
  %1682 = vst [vmem:[%s6 + $0x1c0] sm:$0xff] %v1586
  %1683 = vst [vmem:[%s6 + $0x1c8] sm:$0xff] %v1587
  %1684 = vst [vmem:[%s6 + $0x1d0] sm:$0xff] %v1588
  %1685 = vst [vmem:[%s6 + $0x1d8] sm:$0xff] %v1589
  %1686 = vst [vmem:[%s6 + $0x1e0] sm:$0xff] %v1590
  %1687 = vst [vmem:[%s6 + $0x1e8] sm:$0xff] %v1591
  %1688 = vst [vmem:[%s6 + $0x1f0] sm:$0xff] %v1592
  %1689 = vst [vmem:[%s6 + $0x1f8] sm:$0xff] %v1593
  %1690 = vst [vmem:[%s6 + $0x200] sm:$0xff] %v1594
  %1691 = vst [vmem:[%s6 + $0x208] sm:$0xff] %v1595
  %1692 = vst [vmem:[%s6 + $0x210] sm:$0xff] %v1596
  %1693 = vst [vmem:[%s6 + $0x218] sm:$0xff] %v1597
  %1694 = vst [vmem:[%s6 + $0x220] sm:$0xff] %v1598
  %1695 = vst [vmem:[%s6 + $0x228] sm:$0xff] %v1599
  %1696 = vst [vmem:[%s6 + $0x230] sm:$0xff] %v1600
  %1697 = vst [vmem:[%s6 + $0x238] sm:$0xff] %v1601
  %1698 = vst [vmem:[%s6 + $0x240] sm:$0xff] %v1602
  %1699 = vst [vmem:[%s6 + $0x248] sm:$0xff] %v1603
  %1700 = vst [vmem:[%s6 + $0x250] sm:$0xff] %v1604
  %1701 = vst [vmem:[%s6 + $0x258] sm:$0xff] %v1605
  %1702 = vst [vmem:[%s6 + $0x260] sm:$0xff] %v1606
  %1703 = vst [vmem:[%s6 + $0x268] sm:$0xff] %v1607
  %1704 = vst [vmem:[%s6 + $0x270] sm:$0xff] %v1608
  %1705 = vst [vmem:[%s6 + $0x278] sm:$0xff] %v1609
  %1706 = vst [vmem:[%s6 + $0x280] sm:$0xff] %v1610
  %1707 = vst [vmem:[%s6 + $0x288] sm:$0xff] %v1611
  %1708 = vst [vmem:[%s6 + $0x290] sm:$0xff] %v1612
  %1709 = vst [vmem:[%s6 + $0x298] sm:$0xff] %v1613
  %1710 = vst [vmem:[%s6 + $0x2a0] sm:$0xff] %v1614
  %1711 = vst [vmem:[%s6 + $0x2a8] sm:$0xff] %v1615
  %1712 = vst [vmem:[%s6 + $0x2b0] sm:$0xff] %v1616
  %1713 = vst [vmem:[%s6 + $0x2b8] sm:$0xff] %v1617
  %1714 = vst [vmem:[%s6 + $0x2c0] sm:$0xff] %v1618
  %1715 = vst [vmem:[%s6 + $0x2c8] sm:$0xff] %v1619
  %1716 = vst [vmem:[%s6 + $0x2d0] sm:$0xff] %v1620
  %1717 = vst [vmem:[%s6 + $0x2d8] sm:$0xff] %v1621
  %1718 = vst [vmem:[%s6 + $0x2e0] sm:$0xff] %v1622
  %1719 = vst [vmem:[%s6 + $0x2e8] sm:$0xff] %v1623
  %1720 = vst [vmem:[%s6 + $0x2f0] sm:$0xff] %v1624
  %1721 = vst [vmem:[%s6 + $0x2f8] sm:$0xff] %v1625
  // Predicated region
  $region26: #{bert_input_forward.1} parent=0 // pred_check
    _
  $region27: #{bert_input_forward.1} parent=0 // pred_check_branch
    %1723 = sbr.rel (0) target = $region29
  $region28: #{bert_input_forward.1} parent=0 // pred_region
    _
  $region29: #{bert_input_forward.1} parent=0 // pred_fallthru
    _
  // Predicated region
  $region30: #{bert_input_forward.1} parent=0 // pred_check
    _
  $region31: #{bert_input_forward.1} parent=0 // pred_check_branch
    %1725 = sbr.rel (0) target = $region33
  $region32: #{bert_input_forward.1} parent=0 // pred_region
    _
  $region33: #{bert_input_forward.1} parent=0 // pred_fallthru
    _

</llo_original>
